<compile_context>
chip_gen: v7x
topology: tpu7x:2x2x1
jax: 0.10.0
libtpu: 0.0.40
codegen_flags: <defaults>
</compile_context>

<pallas_src>
import math

import jax
import jax.numpy as jnp
from jax import lax
from jax.experimental import pallas as pl
from jax.experimental.pallas import tpu as pltpu

# ---- problem sizes (toy; kernel structure scales) ---------------------------
B, S, D = 2, 8, 32          # batch, sequence, hidden
H = 4                       # attention heads
HD = D // H                 # head dim
FF = 4 * D                  # feed-forward hidden
EPS = 1e-5

# Flash-style tile sizes along the sequence.
BLK_Q = min(S, 128)
BLK_KV = min(S, 128)
assert S % BLK_Q == 0 and S % BLK_KV == 0

MXU_DTYPE = jnp.bfloat16    # MXU operand dtype; accumulation stays f32


def _layer_norm(x, gamma, beta):
    # x: (rows, D) f32, gamma/beta: (1, D) f32
    mean = jnp.mean(x, axis=-1, keepdims=True)
    var = jnp.mean((x - mean) ** 2, axis=-1, keepdims=True)
    return (x - mean) * lax.rsqrt(var + EPS) * gamma + beta


def _split_heads(t):
    """(rows, D) -> (H, rows, HD): heads on a leading batch axis for the MXU.

    Built from per-head lane slices stacked on a new major axis (pure
    major-dim concat; keeps the (sublane, lane) tile of each slice intact).
    """
    return jnp.stack([t[:, h * HD:(h + 1) * HD] for h in range(H)], axis=0)


# ----------------------- fused encoder-block kernel --------------------------
def encoder_block_kernel(
        x_q_ref, x_kv_ref, mask_ref,
        ln1_g_ref, ln1_b_ref, wq_ref, bq_ref, wkv_ref, bkv_ref, wo_ref, bo_ref,
        ln2_g_ref, ln2_b_ref, w1_ref, b1_ref, w2_ref, b2_ref,
        o_ref,
        q_scr, m_scr, l_scr, acc_scr):
    kv_i = pl.program_id(2)

    # ---- once per (batch, q-block): project Q, reset online-softmax state ---
    @pl.when(kv_i == 0)
    def _init():
        xn_q = _layer_norm(x_q_ref[...].astype(jnp.float32),
                           ln1_g_ref[...], ln1_b_ref[...])
        q = jnp.dot(xn_q.astype(MXU_DTYPE), wq_ref[...],
                    preferred_element_type=jnp.float32) + bq_ref[...]
        q = q * (1.0 / math.sqrt(HD))              # fold 1/sqrt(HD) into Q once
        q_scr[...] = _split_heads(q).astype(MXU_DTYPE)
        m_scr[...] = jnp.full(m_scr.shape, -jnp.inf, dtype=m_scr.dtype)
        l_scr[...] = jnp.zeros(l_scr.shape, dtype=l_scr.dtype)
        acc_scr[...] = jnp.zeros(acc_scr.shape, dtype=acc_scr.dtype)

    # ---- every kv step: project K/V for this tile, online-softmax update ----
    xn_kv = _layer_norm(x_kv_ref[...].astype(jnp.float32),
                        ln1_g_ref[...], ln1_b_ref[...])
    kv = jnp.dot(xn_kv.astype(MXU_DTYPE), wkv_ref[...],
                 preferred_element_type=jnp.float32) + bkv_ref[...]
    k_h = _split_heads(kv[:, :D]).astype(MXU_DTYPE)       # (H, BLK_KV, HD)
    v_h = _split_heads(kv[:, D:]).astype(MXU_DTYPE)       # (H, BLK_KV, HD)
    q_h = q_scr[...]                                      # (H, BLK_Q, HD)

    # heads batched on the leading axis: one MXU sequence, no per-head loop
    s = jnp.einsum("hqd,hkd->hqk", q_h, k_h,
                   preferred_element_type=jnp.float32)    # (H, BLK_Q, BLK_KV)
    s = s + mask_ref[...][None, :, :]                     # additive mask, f32

    m_prev = m_scr[...]
    m_new = jnp.maximum(m_prev, jnp.max(s, axis=-1, keepdims=True))
    alpha = jnp.exp(m_prev - m_new)
    p = jnp.exp(s - m_new)
    l_scr[...] = alpha * l_scr[...] + jnp.sum(p, axis=-1, keepdims=True)
    acc_scr[...] = alpha * acc_scr[...] + jnp.einsum(
        "hqk,hkd->hqd", p.astype(MXU_DTYPE), v_h,
        preferred_element_type=jnp.float32)
    m_scr[...] = m_new

    # ---- last kv step: finish attention, out-proj, residual, FF, store ------
    @pl.when(kv_i == pl.num_programs(2) - 1)
    def _finalize():
        ctx = acc_scr[...] / l_scr[...]                   # exact softmax divide
        # merge heads back into the lane axis -> ONE (BLK_Q, D) @ (D, D) matmul
        ctx2d = jnp.concatenate([ctx[h] for h in range(H)], axis=-1)
        proj = jnp.dot(ctx2d.astype(MXU_DTYPE), wo_ref[...],
                       preferred_element_type=jnp.float32) + bo_ref[...]
        y = x_q_ref[...].astype(jnp.float32) + proj       # residual 1

        yn = _layer_norm(y, ln2_g_ref[...], ln2_b_ref[...])
        h = jnp.dot(yn.astype(MXU_DTYPE), w1_ref[...],
                    preferred_element_type=jnp.float32) + b1_ref[...]
        # TODO(synk): torch nn.GELU defaults to the exact erf form; the
        # injected `ff` is taken to be tanh-GELU here (reference matches).
        h = jax.nn.gelu(h, approximate=True)
        out = y + jnp.dot(h.astype(MXU_DTYPE), w2_ref[...],
                          preferred_element_type=jnp.float32) + b2_ref[...]
        o_ref[...] = out.astype(o_ref.dtype)              # (BLK_Q, D) tile


# ----------------------------- wrapper ---------------------------------------
def transformer_encoder_block(params, x, residual=None, attention_mask=None,
                              attention_bias=None, pos_emb=None, cache=None,
                              use_cache=True, unpad_params=None):
    """Mirrors TransformerEncoderBlock.forward -> (out, residual, next_cache, rest)."""
    assert x.shape == (B, S, D), f"kernel specialized to {(B, S, D)}, got {x.shape}"
    if attention_mask is None:
        attention_mask = jnp.zeros((B, S, S), jnp.float32)
    assert attention_mask.shape == (B, S, S)
    mask = attention_mask.astype(jnp.float32)
    # TODO(synk): attention_bias / pos_emb / KV cache / unpad_params not implemented.

    # Split the fused QKV weight so the kernel never lane-slices it, and cast
    # the MXU-operand weights to bf16 (halves weight DMA; f32 accumulation).
    wq = params["wqkv"][:, :D].astype(MXU_DTYPE)
    wkv = params["wqkv"][:, D:].astype(MXU_DTYPE)
    bq = params["bqkv"][:, :D]
    bkv = params["bqkv"][:, D:]
    wo = params["wo"].astype(MXU_DTYPE)
    w1 = params["w1"].astype(MXU_DTYPE)
    w2 = params["w2"].astype(MXU_DTYPE)

    grid = (B, S // BLK_Q, S // BLK_KV)

    def _const(shape):
        # Same block index every grid step -> fetched once, stays VMEM-resident.
        # TODO(synk): at large D/FF, tile w1/w2 over their own pipelined axis.
        return pl.BlockSpec(shape, lambda b, qi, kv: (0,) * len(shape))

    out = pl.pallas_call(
        encoder_block_kernel,
        out_shape=jax.ShapeDtypeStruct((B, S, D), x.dtype),
        grid_spec=pltpu.PrefetchScalarGridSpec(
            num_scalar_prefetch=0,
            grid=grid,
            in_specs=[
                pl.BlockSpec((None, BLK_Q, D), lambda b, qi, kv: (b, qi, 0)),     # x (q rows)
                pl.BlockSpec((None, BLK_KV, D), lambda b, qi, kv: (b, kv, 0)),    # x (kv rows)
                pl.BlockSpec((None, BLK_Q, BLK_KV), lambda b, qi, kv: (b, qi, kv)),  # mask tile
                _const((1, D)), _const((1, D)),             # ln1 gamma / beta
                _const((D, D)), _const((1, D)),             # wq, bq
                _const((D, 2 * D)), _const((1, 2 * D)),     # wkv, bkv
                _const((D, D)), _const((1, D)),             # wo, bo
                _const((1, D)), _const((1, D)),             # ln2 gamma / beta
                _const((D, FF)), _const((1, FF)),           # w1, b1
                _const((FF, D)), _const((1, D)),            # w2, b2
            ],
            out_specs=pl.BlockSpec((None, BLK_Q, D), lambda b, qi, kv: (b, qi, 0)),
            scratch_shapes=[
                pltpu.VMEM((H, BLK_Q, HD), MXU_DTYPE),      # Q (head-major)
                pltpu.VMEM((H, BLK_Q, 1), jnp.float32),     # running max
                pltpu.VMEM((H, BLK_Q, 1), jnp.float32),     # running denominator
                pltpu.VMEM((H, BLK_Q, HD), jnp.float32),    # f32 output accumulator
            ]),
        compiler_params=pltpu.CompilerParams(
            dimension_semantics=("parallel", "parallel", "arbitrary")),
    )(x, x, mask,
      params["ln1_g"], params["ln1_b"], wq, bq, wkv, bkv, wo, params["bo"],
      params["ln2_g"], params["ln2_b"], w1, params["b1"], w2, params["b2"])

    next_cache = None   # TODO(synk): KV cache not implemented (use_cache ignored)
    rest = None         # ff returns a plain tensor, so `rest` stays None
    return out, residual, next_cache, rest


# ----------------------------- parameter init ---------------------------------
def init_params(key):
    ks = jax.random.split(key, 4)
    std = 0.02
    return {
        "ln1_g": jnp.ones((1, D), jnp.float32),
        "ln1_b": jnp.zeros((1, D), jnp.float32),
        "wqkv": std * jax.random.normal(ks[0], (D, 3 * D), jnp.float32),
        "bqkv": jnp.zeros((1, 3 * D), jnp.float32),
        "wo": std * jax.random.normal(ks[1], (D, D), jnp.float32),
        "bo": jnp.zeros((1, D), jnp.float32),
        "ln2_g": jnp.ones((1, D), jnp.float32),
        "ln2_b": jnp.zeros((1, D), jnp.float32),
        "w1": std * jax.random.normal(ks[2], (D, FF), jnp.float32),
        "b1": jnp.zeros((1, FF), jnp.float32),
        "w2": std * jax.random.normal(ks[3], (FF, D), jnp.float32),
        "b2": jnp.zeros((1, D), jnp.float32),
    }


# ----------------------------- pure-JAX reference -----------------------------
def _ref_block(params, x, mask):
    def ln(v, g, b):
        m = jnp.mean(v, -1, keepdims=True)
        var = jnp.mean((v - m) ** 2, -1, keepdims=True)
        return (v - m) * lax.rsqrt(var + EPS) * g + b

    xn = ln(x, params["ln1_g"], params["ln1_b"])
    qkv = xn @ params["wqkv"] + params["bqkv"]
    q, k, v = jnp.split(qkv, 3, axis=-1)
    q = q.reshape(B, S, H, HD).transpose(0, 2, 1, 3)
    k = k.reshape(B, S, H, HD).transpose(0, 2, 1, 3)
    v = v.reshape(B, S, H, HD).transpose(0, 2, 1, 3)
    scores = jnp.einsum("bhqd,bhkd->bhqk", q, k) / math.sqrt(HD)
    scores = scores + mask[:, None, :, :]
    p = jax.nn.softmax(scores, axis=-1)
    attn = jnp.einsum("bhqk,bhkd->bhqd", p, v).transpose(0, 2, 1, 3).reshape(B, S, D)
    y = x + attn @ params["wo"] + params["bo"]
    yn = ln(y, params["ln2_g"], params["ln2_b"])
    h = jax.nn.gelu(yn @ params["w1"] + params["b1"], approximate=True)
    return y + h @ params["w2"] + params["b2"]


if __name__ == "__main__":
    key = jax.random.PRNGKey(0)
    pkey, xkey, mkey = jax.random.split(key, 3)
    params = init_params(pkey)
    x = jax.random.normal(xkey, (B, S, D), jnp.float32)
    # additive attention mask: 0 = attend, large negative = blocked
    keep = (jax.random.uniform(mkey, (B, S, S)) > 0.1).astype(jnp.float32)
    mask = (1.0 - keep) * (-1e9)

    out, residual, next_cache, rest = transformer_encoder_block(
        params, x, residual=None, attention_mask=mask)
    out = jax.block_until_ready(out)

    ref = _ref_block(params, x, mask)
    assert out.shape == (B, S, D)
    err = float(jnp.max(jnp.abs(out - ref)))
    # bf16 MXU operands (activations + weights) vs. the f32 reference: expected
    # error is O(1e-3); tolerance leaves >5x margin.
    assert jnp.allclose(out, ref, atol=2e-2, rtol=2e-2), err
    assert residual is None and next_cache is None and rest is None
    print("KERNEL_OK")
</pallas_src>

<mosaic_0001>
module attributes {stable_mosaic.version = 11 : i64} {
  func.func @encoder_block_kernel(%arg0: i32, %arg1: i32, %arg2: i32, %arg3: memref<1x8x32xf32, #tpu.memory_space<vmem>>, %arg4: memref<1x8x32xf32, #tpu.memory_space<vmem>>, %arg5: memref<1x8x8xf32, #tpu.memory_space<vmem>>, %arg6: memref<1x32xf32, #tpu.memory_space<vmem>>, %arg7: memref<1x32xf32, #tpu.memory_space<vmem>>, %arg8: memref<32x32xbf16, #tpu.memory_space<vmem>>, %arg9: memref<1x32xf32, #tpu.memory_space<vmem>>, %arg10: memref<32x64xbf16, #tpu.memory_space<vmem>>, %arg11: memref<1x64xf32, #tpu.memory_space<vmem>>, %arg12: memref<32x32xbf16, #tpu.memory_space<vmem>>, %arg13: memref<1x32xf32, #tpu.memory_space<vmem>>, %arg14: memref<1x32xf32, #tpu.memory_space<vmem>>, %arg15: memref<1x32xf32, #tpu.memory_space<vmem>>, %arg16: memref<32x128xbf16, #tpu.memory_space<vmem>>, %arg17: memref<1x128xf32, #tpu.memory_space<vmem>>, %arg18: memref<128x32xbf16, #tpu.memory_space<vmem>>, %arg19: memref<1x32xf32, #tpu.memory_space<vmem>>, %arg20: memref<1x8x32xf32, #tpu.memory_space<vmem>>, %arg21: memref<4x8x8xbf16, #tpu.memory_space<vmem>>, %arg22: memref<4x8x1xf32, #tpu.memory_space<vmem>>, %arg23: memref<4x8x1xf32, #tpu.memory_space<vmem>>, %arg24: memref<4x8x8xf32, #tpu.memory_space<vmem>>) attributes {dimension_semantics = [#tpu.dimension_semantics<parallel>, #tpu.dimension_semantics<parallel>, #tpu.dimension_semantics<arbitrary>], iteration_bounds = array<i64: 2, 1, 1>, scalar_prefetch = 0 : i64, scratch_operands = 4 : i64, tpu.core_type = #tpu.core_type<tc>, window_params = [{transform_indices = @transform_0, window_bounds = array<i64: 1, 8, 32>}, {transform_indices = @transform_1, window_bounds = array<i64: 1, 8, 32>}, {transform_indices = @transform_2, window_bounds = array<i64: 1, 8, 8>}, {pipeline_mode = #tpu.pipeline_mode<synchronous>, transform_indices = @transform_3, window_bounds = array<i64: 1, 32>}, {pipeline_mode = #tpu.pipeline_mode<synchronous>, transform_indices = @transform_4, window_bounds = array<i64: 1, 32>}, {pipeline_mode = #tpu.pipeline_mode<synchronous>, transform_indices = @transform_5, window_bounds = array<i64: 32, 32>}, {pipeline_mode = #tpu.pipeline_mode<synchronous>, transform_indices = @transform_6, window_bounds = array<i64: 1, 32>}, {pipeline_mode = #tpu.pipeline_mode<synchronous>, transform_indices = @transform_7, window_bounds = array<i64: 32, 64>}, {pipeline_mode = #tpu.pipeline_mode<synchronous>, transform_indices = @transform_8, window_bounds = array<i64: 1, 64>}, {pipeline_mode = #tpu.pipeline_mode<synchronous>, transform_indices = @transform_9, window_bounds = array<i64: 32, 32>}, {pipeline_mode = #tpu.pipeline_mode<synchronous>, transform_indices = @transform_10, window_bounds = array<i64: 1, 32>}, {pipeline_mode = #tpu.pipeline_mode<synchronous>, transform_indices = @transform_11, window_bounds = array<i64: 1, 32>}, {pipeline_mode = #tpu.pipeline_mode<synchronous>, transform_indices = @transform_12, window_bounds = array<i64: 1, 32>}, {pipeline_mode = #tpu.pipeline_mode<synchronous>, transform_indices = @transform_13, window_bounds = array<i64: 32, 128>}, {pipeline_mode = #tpu.pipeline_mode<synchronous>, transform_indices = @transform_14, window_bounds = array<i64: 1, 128>}, {pipeline_mode = #tpu.pipeline_mode<synchronous>, transform_indices = @transform_15, window_bounds = array<i64: 128, 32>}, {pipeline_mode = #tpu.pipeline_mode<synchronous>, transform_indices = @transform_16, window_bounds = array<i64: 1, 32>}, {transform_indices = @transform_17, window_bounds = array<i64: 1, 8, 32>}]} {
    %c0_i32 = arith.constant 0 : i32
    %0 = arith.cmpi eq, %arg2, %c0_i32 : i32
    %1 = arith.extui %0 : i1 to i32
    %c0_i32_0 = arith.constant 0 : i32
    %2 = arith.cmpi ne, %1, %c0_i32_0 : i32
    scf.if %2 {
      %c0_46 = arith.constant 0 : index
      %c0_47 = arith.constant 0 : index
      %c0_48 = arith.constant 0 : index
      %90 = vector.load %arg3[%c0_46, %c0_47, %c0_48] : memref<1x8x32xf32, #tpu.memory_space<vmem>>, vector<1x8x32xf32>
      %91 = vector.shape_cast %90 : vector<1x8x32xf32> to vector<8x32xf32>
      %c0_49 = arith.constant 0 : index
      %c0_50 = arith.constant 0 : index
      %92 = vector.load %arg6[%c0_49, %c0_50] : memref<1x32xf32, #tpu.memory_space<vmem>>, vector<1x32xf32>
      %c0_51 = arith.constant 0 : index
      %c0_52 = arith.constant 0 : index
      %93 = vector.load %arg7[%c0_51, %c0_52] : memref<1x32xf32, #tpu.memory_space<vmem>>, vector<1x32xf32>
      %cst_53 = arith.constant dense<0.000000e+00> : vector<8xf32>
      %94 = vector.multi_reduction <add>, %91, %cst_53 [1] : vector<8x32xf32> to vector<8xf32>
      %95 = vector.shape_cast %94 : vector<8xf32> to vector<8x1xf32>
      %cst_54 = arith.constant 3.200000e+01 : f32
      %96 = vector.broadcast %cst_54 : f32 to vector<8x1xf32>
      %97 = arith.divf %95, %96 : vector<8x1xf32>
      %98 = vector.broadcast %97 : vector<8x1xf32> to vector<8x32xf32>
      %99 = arith.subf %91, %98 : vector<8x32xf32>
      %100 = arith.mulf %99, %99 : vector<8x32xf32>
      %cst_55 = arith.constant dense<0.000000e+00> : vector<8xf32>
      %101 = vector.multi_reduction <add>, %100, %cst_55 [1] : vector<8x32xf32> to vector<8xf32>
      %102 = vector.shape_cast %101 : vector<8xf32> to vector<8x1xf32>
      %cst_56 = arith.constant 3.200000e+01 : f32
      %103 = vector.broadcast %cst_56 : f32 to vector<8x1xf32>
      %104 = arith.divf %102, %103 : vector<8x1xf32>
      %105 = vector.broadcast %97 : vector<8x1xf32> to vector<8x32xf32>
      %106 = arith.subf %91, %105 : vector<8x32xf32>
      %cst_57 = arith.constant 9.99999974E-6 : f32
      %107 = vector.broadcast %cst_57 : f32 to vector<8x1xf32>
      %108 = arith.addf %104, %107 : vector<8x1xf32>
      %109 = math.rsqrt %108 : vector<8x1xf32>
      %110 = vector.broadcast %109 : vector<8x1xf32> to vector<8x32xf32>
      %111 = arith.mulf %106, %110 : vector<8x32xf32>
      %112 = vector.broadcast %92 : vector<1x32xf32> to vector<8x32xf32>
      %113 = arith.mulf %111, %112 : vector<8x32xf32>
      %114 = vector.broadcast %93 : vector<1x32xf32> to vector<8x32xf32>
      %115 = arith.addf %113, %114 : vector<8x32xf32>
      %116 = arith.truncf %115 : vector<8x32xf32> to vector<8x32xbf16>
      %c0_58 = arith.constant 0 : index
      %c0_59 = arith.constant 0 : index
      %117 = vector.load %arg8[%c0_58, %c0_59] : memref<32x32xbf16, #tpu.memory_space<vmem>>, vector<32x32xbf16>
      %cst_60 = arith.constant dense<0.000000e+00> : vector<8x32xf32>
      %118 = tpu.matmul %116, %117, %cst_60 {dimension_numbers = #tpu.dot_dimension_numbers<[1], [0], [0], [1], [0, 0, 1, 1], [], []>} : vector<8x32xbf16>, vector<32x32xbf16>, vector<8x32xf32> -> vector<8x32xf32>
      %c0_61 = arith.constant 0 : index
      %c0_62 = arith.constant 0 : index
      %119 = vector.load %arg9[%c0_61, %c0_62] : memref<1x32xf32, #tpu.memory_space<vmem>>, vector<1x32xf32>
      %120 = vector.broadcast %119 : vector<1x32xf32> to vector<8x32xf32>
      %121 = arith.addf %118, %120 : vector<8x32xf32>
      %cst_63 = arith.constant 0.353553385 : f32
      %122 = vector.broadcast %cst_63 : f32 to vector<8x32xf32>
      %123 = arith.mulf %121, %122 : vector<8x32xf32>
      %124 = vector.extract_strided_slice %123 {offsets = [0, 0], sizes = [8, 8], strides = [1, 1]} : vector<8x32xf32> to vector<8x8xf32>
      %125 = vector.extract_strided_slice %123 {offsets = [0, 8], sizes = [8, 8], strides = [1, 1]} : vector<8x32xf32> to vector<8x8xf32>
      %126 = vector.extract_strided_slice %123 {offsets = [0, 16], sizes = [8, 8], strides = [1, 1]} : vector<8x32xf32> to vector<8x8xf32>
      %127 = vector.extract_strided_slice %123 {offsets = [0, 24], sizes = [8, 8], strides = [1, 1]} : vector<8x32xf32> to vector<8x8xf32>
      %128 = vector.shape_cast %124 : vector<8x8xf32> to vector<1x8x8xf32>
      %129 = vector.shape_cast %125 : vector<8x8xf32> to vector<1x8x8xf32>
      %130 = vector.shape_cast %126 : vector<8x8xf32> to vector<1x8x8xf32>
      %131 = vector.shape_cast %127 : vector<8x8xf32> to vector<1x8x8xf32>
      %132 = tpu.concatenate %128, %129, %130, %131 in 0 : vector<1x8x8xf32>, vector<1x8x8xf32>, vector<1x8x8xf32>, vector<1x8x8xf32> -> vector<4x8x8xf32>
      %133 = arith.truncf %132 : vector<4x8x8xf32> to vector<4x8x8xbf16>
      %c0_64 = arith.constant 0 : index
      %c0_65 = arith.constant 0 : index
      %c0_66 = arith.constant 0 : index
      %134 = vector.load %arg21[%c0_64, %c0_65, %c0_66] : memref<4x8x8xbf16, #tpu.memory_space<vmem>>, vector<4x8x8xbf16>
      tpu.vector_store %arg21[%c0_64, %c0_65, %c0_66], %133 {strides = array<i32>} : memref<4x8x8xbf16, #tpu.memory_space<vmem>>, vector<4x8x8xbf16>,
      %cst_67 = arith.constant 0xFF800000 : f32
      %135 = vector.broadcast %cst_67 : f32 to vector<4x8x1xf32>
      %c0_68 = arith.constant 0 : index
      %c0_69 = arith.constant 0 : index
      %c0_70 = arith.constant 0 : index
      %136 = vector.load %arg22[%c0_68, %c0_69, %c0_70] : memref<4x8x1xf32, #tpu.memory_space<vmem>>, vector<4x8x1xf32>
      tpu.vector_store %arg22[%c0_68, %c0_69, %c0_70], %135 {strides = array<i32>} : memref<4x8x1xf32, #tpu.memory_space<vmem>>, vector<4x8x1xf32>,
      %cst_71 = arith.constant 0.000000e+00 : f32
      %137 = vector.broadcast %cst_71 : f32 to vector<4x8x1xf32>
      %c0_72 = arith.constant 0 : index
      %c0_73 = arith.constant 0 : index
      %c0_74 = arith.constant 0 : index
      %138 = vector.load %arg23[%c0_72, %c0_73, %c0_74] : memref<4x8x1xf32, #tpu.memory_space<vmem>>, vector<4x8x1xf32>
      tpu.vector_store %arg23[%c0_72, %c0_73, %c0_74], %137 {strides = array<i32>} : memref<4x8x1xf32, #tpu.memory_space<vmem>>, vector<4x8x1xf32>,
      %cst_75 = arith.constant 0.000000e+00 : f32
      %139 = vector.broadcast %cst_75 : f32 to vector<4x8x8xf32>
      %c0_76 = arith.constant 0 : index
      %c0_77 = arith.constant 0 : index
      %c0_78 = arith.constant 0 : index
      %140 = vector.load %arg24[%c0_76, %c0_77, %c0_78] : memref<4x8x8xf32, #tpu.memory_space<vmem>>, vector<4x8x8xf32>
      tpu.vector_store %arg24[%c0_76, %c0_77, %c0_78], %139 {strides = array<i32>} : memref<4x8x8xf32, #tpu.memory_space<vmem>>, vector<4x8x8xf32>,
    } else {
    }
    %c0 = arith.constant 0 : index
    %c0_1 = arith.constant 0 : index
    %c0_2 = arith.constant 0 : index
    %3 = vector.load %arg4[%c0, %c0_1, %c0_2] : memref<1x8x32xf32, #tpu.memory_space<vmem>>, vector<1x8x32xf32>
    %4 = vector.shape_cast %3 : vector<1x8x32xf32> to vector<8x32xf32>
    %c0_3 = arith.constant 0 : index
    %c0_4 = arith.constant 0 : index
    %5 = vector.load %arg6[%c0_3, %c0_4] : memref<1x32xf32, #tpu.memory_space<vmem>>, vector<1x32xf32>
    %c0_5 = arith.constant 0 : index
    %c0_6 = arith.constant 0 : index
    %6 = vector.load %arg7[%c0_5, %c0_6] : memref<1x32xf32, #tpu.memory_space<vmem>>, vector<1x32xf32>
    %cst = arith.constant dense<0.000000e+00> : vector<8xf32>
    %7 = vector.multi_reduction <add>, %4, %cst [1] : vector<8x32xf32> to vector<8xf32>
    %8 = vector.shape_cast %7 : vector<8xf32> to vector<8x1xf32>
    %cst_7 = arith.constant 3.200000e+01 : f32
    %9 = vector.broadcast %cst_7 : f32 to vector<8x1xf32>
    %10 = arith.divf %8, %9 : vector<8x1xf32>
    %11 = vector.broadcast %10 : vector<8x1xf32> to vector<8x32xf32>
    %12 = arith.subf %4, %11 : vector<8x32xf32>
    %13 = arith.mulf %12, %12 : vector<8x32xf32>
    %cst_8 = arith.constant dense<0.000000e+00> : vector<8xf32>
    %14 = vector.multi_reduction <add>, %13, %cst_8 [1] : vector<8x32xf32> to vector<8xf32>
    %15 = vector.shape_cast %14 : vector<8xf32> to vector<8x1xf32>
    %cst_9 = arith.constant 3.200000e+01 : f32
    %16 = vector.broadcast %cst_9 : f32 to vector<8x1xf32>
    %17 = arith.divf %15, %16 : vector<8x1xf32>
    %18 = vector.broadcast %10 : vector<8x1xf32> to vector<8x32xf32>
    %19 = arith.subf %4, %18 : vector<8x32xf32>
    %cst_10 = arith.constant 9.99999974E-6 : f32
    %20 = vector.broadcast %cst_10 : f32 to vector<8x1xf32>
    %21 = arith.addf %17, %20 : vector<8x1xf32>
    %22 = math.rsqrt %21 : vector<8x1xf32>
    %23 = vector.broadcast %22 : vector<8x1xf32> to vector<8x32xf32>
    %24 = arith.mulf %19, %23 : vector<8x32xf32>
    %25 = vector.broadcast %5 : vector<1x32xf32> to vector<8x32xf32>
    %26 = arith.mulf %24, %25 : vector<8x32xf32>
    %27 = vector.broadcast %6 : vector<1x32xf32> to vector<8x32xf32>
    %28 = arith.addf %26, %27 : vector<8x32xf32>
    %29 = arith.truncf %28 : vector<8x32xf32> to vector<8x32xbf16>
    %c0_11 = arith.constant 0 : index
    %c0_12 = arith.constant 0 : index
    %30 = vector.load %arg10[%c0_11, %c0_12] : memref<32x64xbf16, #tpu.memory_space<vmem>>, vector<32x64xbf16>
    %cst_13 = arith.constant dense<0.000000e+00> : vector<8x64xf32>
    %31 = tpu.matmul %29, %30, %cst_13 {dimension_numbers = #tpu.dot_dimension_numbers<[1], [0], [0], [1], [0, 0, 1, 1], [], []>} : vector<8x32xbf16>, vector<32x64xbf16>, vector<8x64xf32> -> vector<8x64xf32>
    %c0_14 = arith.constant 0 : index
    %c0_15 = arith.constant 0 : index
    %32 = vector.load %arg11[%c0_14, %c0_15] : memref<1x64xf32, #tpu.memory_space<vmem>>, vector<1x64xf32>
    %33 = vector.broadcast %32 : vector<1x64xf32> to vector<8x64xf32>
    %34 = arith.addf %31, %33 : vector<8x64xf32>
    %35 = vector.extract_strided_slice %34 {offsets = [0, 0], sizes = [8, 32], strides = [1, 1]} : vector<8x64xf32> to vector<8x32xf32>
    %36 = vector.extract_strided_slice %35 {offsets = [0, 0], sizes = [8, 8], strides = [1, 1]} : vector<8x32xf32> to vector<8x8xf32>
    %37 = vector.extract_strided_slice %35 {offsets = [0, 8], sizes = [8, 8], strides = [1, 1]} : vector<8x32xf32> to vector<8x8xf32>
    %38 = vector.extract_strided_slice %35 {offsets = [0, 16], sizes = [8, 8], strides = [1, 1]} : vector<8x32xf32> to vector<8x8xf32>
    %39 = vector.extract_strided_slice %35 {offsets = [0, 24], sizes = [8, 8], strides = [1, 1]} : vector<8x32xf32> to vector<8x8xf32>
    %40 = vector.shape_cast %36 : vector<8x8xf32> to vector<1x8x8xf32>
    %41 = vector.shape_cast %37 : vector<8x8xf32> to vector<1x8x8xf32>
    %42 = vector.shape_cast %38 : vector<8x8xf32> to vector<1x8x8xf32>
    %43 = vector.shape_cast %39 : vector<8x8xf32> to vector<1x8x8xf32>
    %44 = tpu.concatenate %40, %41, %42, %43 in 0 : vector<1x8x8xf32>, vector<1x8x8xf32>, vector<1x8x8xf32>, vector<1x8x8xf32> -> vector<4x8x8xf32>
    %45 = arith.truncf %44 : vector<4x8x8xf32> to vector<4x8x8xbf16>
    %46 = vector.extract_strided_slice %34 {offsets = [0, 32], sizes = [8, 32], strides = [1, 1]} : vector<8x64xf32> to vector<8x32xf32>
    %47 = vector.extract_strided_slice %46 {offsets = [0, 0], sizes = [8, 8], strides = [1, 1]} : vector<8x32xf32> to vector<8x8xf32>
    %48 = vector.extract_strided_slice %46 {offsets = [0, 8], sizes = [8, 8], strides = [1, 1]} : vector<8x32xf32> to vector<8x8xf32>
    %49 = vector.extract_strided_slice %46 {offsets = [0, 16], sizes = [8, 8], strides = [1, 1]} : vector<8x32xf32> to vector<8x8xf32>
    %50 = vector.extract_strided_slice %46 {offsets = [0, 24], sizes = [8, 8], strides = [1, 1]} : vector<8x32xf32> to vector<8x8xf32>
    %51 = vector.shape_cast %47 : vector<8x8xf32> to vector<1x8x8xf32>
    %52 = vector.shape_cast %48 : vector<8x8xf32> to vector<1x8x8xf32>
    %53 = vector.shape_cast %49 : vector<8x8xf32> to vector<1x8x8xf32>
    %54 = vector.shape_cast %50 : vector<8x8xf32> to vector<1x8x8xf32>
    %55 = tpu.concatenate %51, %52, %53, %54 in 0 : vector<1x8x8xf32>, vector<1x8x8xf32>, vector<1x8x8xf32>, vector<1x8x8xf32> -> vector<4x8x8xf32>
    %56 = arith.truncf %55 : vector<4x8x8xf32> to vector<4x8x8xbf16>
    %c0_16 = arith.constant 0 : index
    %c0_17 = arith.constant 0 : index
    %c0_18 = arith.constant 0 : index
    %57 = vector.load %arg21[%c0_16, %c0_17, %c0_18] : memref<4x8x8xbf16, #tpu.memory_space<vmem>>, vector<4x8x8xbf16>
    "tpu.trace_start"() <{level = 10 : i32, message = "hqd,hkd->hqk"}> : () -> ()
    %cst_19 = arith.constant dense<0.000000e+00> : vector<4x8x8xf32>
    %58 = tpu.matmul %57, %45, %cst_19 {dimension_numbers = #tpu.dot_dimension_numbers<[2], [2], [1], [1], [0, 0, 0, 1, 1, 1], [0], [0]>} : vector<4x8x8xbf16>, vector<4x8x8xbf16>, vector<4x8x8xf32> -> vector<4x8x8xf32>
    "tpu.trace_stop"() : () -> ()
    %c0_20 = arith.constant 0 : index
    %c0_21 = arith.constant 0 : index
    %c0_22 = arith.constant 0 : index
    %59 = vector.load %arg5[%c0_20, %c0_21, %c0_22] : memref<1x8x8xf32, #tpu.memory_space<vmem>>, vector<1x8x8xf32>
    %60 = vector.shape_cast %59 : vector<1x8x8xf32> to vector<8x8xf32>
    %61 = vector.shape_cast %60 : vector<8x8xf32> to vector<1x8x8xf32>
    %62 = vector.broadcast %61 : vector<1x8x8xf32> to vector<4x8x8xf32>
    %63 = arith.addf %58, %62 : vector<4x8x8xf32>
    %c0_23 = arith.constant 0 : index
    %c0_24 = arith.constant 0 : index
    %c0_25 = arith.constant 0 : index
    %64 = vector.load %arg22[%c0_23, %c0_24, %c0_25] : memref<4x8x1xf32, #tpu.memory_space<vmem>>, vector<4x8x1xf32>
    %cst_26 = arith.constant dense<0xFF800000> : vector<4x8xf32>
    %65 = vector.multi_reduction <maximumf>, %63, %cst_26 [2] : vector<4x8x8xf32> to vector<4x8xf32>
    %66 = vector.shape_cast %65 : vector<4x8xf32> to vector<4x8x1xf32>
    %67 = arith.maximumf %64, %66 : vector<4x8x1xf32>
    %68 = arith.subf %64, %67 : vector<4x8x1xf32>
    %69 = math.exp %68 : vector<4x8x1xf32>
    %70 = vector.broadcast %67 : vector<4x8x1xf32> to vector<4x8x8xf32>
    %71 = arith.subf %63, %70 : vector<4x8x8xf32>
    %72 = math.exp %71 : vector<4x8x8xf32>
    %c0_27 = arith.constant 0 : index
    %c0_28 = arith.constant 0 : index
    %c0_29 = arith.constant 0 : index
    %73 = vector.load %arg23[%c0_27, %c0_28, %c0_29] : memref<4x8x1xf32, #tpu.memory_space<vmem>>, vector<4x8x1xf32>
    %74 = arith.mulf %69, %73 : vector<4x8x1xf32>
    %cst_30 = arith.constant dense<0.000000e+00> : vector<4x8xf32>
    %75 = vector.multi_reduction <add>, %72, %cst_30 [2] : vector<4x8x8xf32> to vector<4x8xf32>
    %76 = vector.shape_cast %75 : vector<4x8xf32> to vector<4x8x1xf32>
    %77 = arith.addf %74, %76 : vector<4x8x1xf32>
    %c0_31 = arith.constant 0 : index
    %c0_32 = arith.constant 0 : index
    %c0_33 = arith.constant 0 : index
    %78 = vector.load %arg23[%c0_31, %c0_32, %c0_33] : memref<4x8x1xf32, #tpu.memory_space<vmem>>, vector<4x8x1xf32>
    tpu.vector_store %arg23[%c0_31, %c0_32, %c0_33], %77 {strides = array<i32>} : memref<4x8x1xf32, #tpu.memory_space<vmem>>, vector<4x8x1xf32>,
    %c0_34 = arith.constant 0 : index
    %c0_35 = arith.constant 0 : index
    %c0_36 = arith.constant 0 : index
    %79 = vector.load %arg24[%c0_34, %c0_35, %c0_36] : memref<4x8x8xf32, #tpu.memory_space<vmem>>, vector<4x8x8xf32>
    %80 = vector.broadcast %69 : vector<4x8x1xf32> to vector<4x8x8xf32>
    %81 = arith.mulf %80, %79 : vector<4x8x8xf32>
    %82 = arith.truncf %72 : vector<4x8x8xf32> to vector<4x8x8xbf16>
    "tpu.trace_start"() <{level = 10 : i32, message = "hqk,hkd->hqd"}> : () -> ()
    %cst_37 = arith.constant dense<0.000000e+00> : vector<4x8x8xf32>
    %83 = tpu.matmul %82, %56, %cst_37 {dimension_numbers = #tpu.dot_dimension_numbers<[2], [1], [1], [2], [0, 0, 0, 1, 1, 2], [0], [0]>} : vector<4x8x8xbf16>, vector<4x8x8xbf16>, vector<4x8x8xf32> -> vector<4x8x8xf32>
    "tpu.trace_stop"() : () -> ()
    %84 = arith.addf %81, %83 : vector<4x8x8xf32>
    %c0_38 = arith.constant 0 : index
    %c0_39 = arith.constant 0 : index
    %c0_40 = arith.constant 0 : index
    %85 = vector.load %arg24[%c0_38, %c0_39, %c0_40] : memref<4x8x8xf32, #tpu.memory_space<vmem>>, vector<4x8x8xf32>
    tpu.vector_store %arg24[%c0_38, %c0_39, %c0_40], %84 {strides = array<i32>} : memref<4x8x8xf32, #tpu.memory_space<vmem>>, vector<4x8x8xf32>,
    %c0_41 = arith.constant 0 : index
    %c0_42 = arith.constant 0 : index
    %c0_43 = arith.constant 0 : index
    %86 = vector.load %arg22[%c0_41, %c0_42, %c0_43] : memref<4x8x1xf32, #tpu.memory_space<vmem>>, vector<4x8x1xf32>
    tpu.vector_store %arg22[%c0_41, %c0_42, %c0_43], %67 {strides = array<i32>} : memref<4x8x1xf32, #tpu.memory_space<vmem>>, vector<4x8x1xf32>,
    %c0_i32_44 = arith.constant 0 : i32
    %87 = arith.cmpi eq, %arg2, %c0_i32_44 : i32
    %88 = arith.extui %87 : i1 to i32
    %c0_i32_45 = arith.constant 0 : i32
    %89 = arith.cmpi ne, %88, %c0_i32_45 : i32
    scf.if %89 {
      %c0_46 = arith.constant 0 : index
      %c0_47 = arith.constant 0 : index
      %c0_48 = arith.constant 0 : index
      %90 = vector.load %arg24[%c0_46, %c0_47, %c0_48] : memref<4x8x8xf32, #tpu.memory_space<vmem>>, vector<4x8x8xf32>
      %c0_49 = arith.constant 0 : index
      %c0_50 = arith.constant 0 : index
      %c0_51 = arith.constant 0 : index
      %91 = vector.load %arg23[%c0_49, %c0_50, %c0_51] : memref<4x8x1xf32, #tpu.memory_space<vmem>>, vector<4x8x1xf32>
      %92 = vector.broadcast %91 : vector<4x8x1xf32> to vector<4x8x8xf32>
      %93 = arith.divf %90, %92 : vector<4x8x8xf32>
      %94 = vector.extract_strided_slice %93 {offsets = [0, 0, 0], sizes = [1, 8, 8], strides = [1, 1, 1]} : vector<4x8x8xf32> to vector<1x8x8xf32>
      %95 = vector.shape_cast %94 : vector<1x8x8xf32> to vector<8x8xf32>
      %96 = vector.extract_strided_slice %93 {offsets = [1, 0, 0], sizes = [1, 8, 8], strides = [1, 1, 1]} : vector<4x8x8xf32> to vector<1x8x8xf32>
      %97 = vector.shape_cast %96 : vector<1x8x8xf32> to vector<8x8xf32>
      %98 = vector.extract_strided_slice %93 {offsets = [2, 0, 0], sizes = [1, 8, 8], strides = [1, 1, 1]} : vector<4x8x8xf32> to vector<1x8x8xf32>
      %99 = vector.shape_cast %98 : vector<1x8x8xf32> to vector<8x8xf32>
      %100 = vector.extract_strided_slice %93 {offsets = [3, 0, 0], sizes = [1, 8, 8], strides = [1, 1, 1]} : vector<4x8x8xf32> to vector<1x8x8xf32>
      %101 = vector.shape_cast %100 : vector<1x8x8xf32> to vector<8x8xf32>
      %102 = tpu.concatenate %95, %97, %99, %101 in 1 : vector<8x8xf32>, vector<8x8xf32>, vector<8x8xf32>, vector<8x8xf32> -> vector<8x32xf32>
      %103 = arith.truncf %102 : vector<8x32xf32> to vector<8x32xbf16>
      %c0_52 = arith.constant 0 : index
      %c0_53 = arith.constant 0 : index
      %104 = vector.load %arg12[%c0_52, %c0_53] : memref<32x32xbf16, #tpu.memory_space<vmem>>, vector<32x32xbf16>
      %cst_54 = arith.constant dense<0.000000e+00> : vector<8x32xf32>
      %105 = tpu.matmul %103, %104, %cst_54 {dimension_numbers = #tpu.dot_dimension_numbers<[1], [0], [0], [1], [0, 0, 1, 1], [], []>} : vector<8x32xbf16>, vector<32x32xbf16>, vector<8x32xf32> -> vector<8x32xf32>
      %c0_55 = arith.constant 0 : index
      %c0_56 = arith.constant 0 : index
      %106 = vector.load %arg13[%c0_55, %c0_56] : memref<1x32xf32, #tpu.memory_space<vmem>>, vector<1x32xf32>
      %107 = vector.broadcast %106 : vector<1x32xf32> to vector<8x32xf32>
      %108 = arith.addf %105, %107 : vector<8x32xf32>
      %c0_57 = arith.constant 0 : index
      %c0_58 = arith.constant 0 : index
      %c0_59 = arith.constant 0 : index
      %109 = vector.load %arg3[%c0_57, %c0_58, %c0_59] : memref<1x8x32xf32, #tpu.memory_space<vmem>>, vector<1x8x32xf32>
      %110 = vector.shape_cast %109 : vector<1x8x32xf32> to vector<8x32xf32>
      %111 = arith.addf %110, %108 : vector<8x32xf32>
      %c0_60 = arith.constant 0 : index
      %c0_61 = arith.constant 0 : index
      %112 = vector.load %arg14[%c0_60, %c0_61] : memref<1x32xf32, #tpu.memory_space<vmem>>, vector<1x32xf32>
      %c0_62 = arith.constant 0 : index
      %c0_63 = arith.constant 0 : index
      %113 = vector.load %arg15[%c0_62, %c0_63] : memref<1x32xf32, #tpu.memory_space<vmem>>, vector<1x32xf32>
      %cst_64 = arith.constant dense<0.000000e+00> : vector<8xf32>
      %114 = vector.multi_reduction <add>, %111, %cst_64 [1] : vector<8x32xf32> to vector<8xf32>
      %115 = vector.shape_cast %114 : vector<8xf32> to vector<8x1xf32>
      %cst_65 = arith.constant 3.200000e+01 : f32
      %116 = vector.broadcast %cst_65 : f32 to vector<8x1xf32>
      %117 = arith.divf %115, %116 : vector<8x1xf32>
      %118 = vector.broadcast %117 : vector<8x1xf32> to vector<8x32xf32>
      %119 = arith.subf %111, %118 : vector<8x32xf32>
      %120 = arith.mulf %119, %119 : vector<8x32xf32>
      %cst_66 = arith.constant dense<0.000000e+00> : vector<8xf32>
      %121 = vector.multi_reduction <add>, %120, %cst_66 [1] : vector<8x32xf32> to vector<8xf32>
      %122 = vector.shape_cast %121 : vector<8xf32> to vector<8x1xf32>
      %cst_67 = arith.constant 3.200000e+01 : f32
      %123 = vector.broadcast %cst_67 : f32 to vector<8x1xf32>
      %124 = arith.divf %122, %123 : vector<8x1xf32>
      %125 = vector.broadcast %117 : vector<8x1xf32> to vector<8x32xf32>
      %126 = arith.subf %111, %125 : vector<8x32xf32>
      %cst_68 = arith.constant 9.99999974E-6 : f32
      %127 = vector.broadcast %cst_68 : f32 to vector<8x1xf32>
      %128 = arith.addf %124, %127 : vector<8x1xf32>
      %129 = math.rsqrt %128 : vector<8x1xf32>
      %130 = vector.broadcast %129 : vector<8x1xf32> to vector<8x32xf32>
      %131 = arith.mulf %126, %130 : vector<8x32xf32>
      %132 = vector.broadcast %112 : vector<1x32xf32> to vector<8x32xf32>
      %133 = arith.mulf %131, %132 : vector<8x32xf32>
      %134 = vector.broadcast %113 : vector<1x32xf32> to vector<8x32xf32>
      %135 = arith.addf %133, %134 : vector<8x32xf32>
      %136 = arith.truncf %135 : vector<8x32xf32> to vector<8x32xbf16>
      %c0_69 = arith.constant 0 : index
      %c0_70 = arith.constant 0 : index
      %137 = vector.load %arg16[%c0_69, %c0_70] : memref<32x128xbf16, #tpu.memory_space<vmem>>, vector<32x128xbf16>
      %cst_71 = arith.constant dense<0.000000e+00> : vector<8x128xf32>
      %138 = tpu.matmul %136, %137, %cst_71 {dimension_numbers = #tpu.dot_dimension_numbers<[1], [0], [0], [1], [0, 0, 1, 1], [], []>} : vector<8x32xbf16>, vector<32x128xbf16>, vector<8x128xf32> -> vector<8x128xf32>
      %c0_72 = arith.constant 0 : index
      %c0_73 = arith.constant 0 : index
      %139 = vector.load %arg17[%c0_72, %c0_73] : memref<1x128xf32, #tpu.memory_space<vmem>>, vector<1x128xf32>
      %140 = vector.broadcast %139 : vector<1x128xf32> to vector<8x128xf32>
      %141 = arith.addf %138, %140 : vector<8x128xf32>
      %142 = arith.mulf %141, %141 : vector<8x128xf32>
      %143 = arith.mulf %141, %142 : vector<8x128xf32>
      %cst_74 = arith.constant 4.471500e-02 : f32
      %144 = vector.broadcast %cst_74 : f32 to vector<8x128xf32>
      %145 = arith.mulf %144, %143 : vector<8x128xf32>
      %146 = arith.addf %141, %145 : vector<8x128xf32>
      %cst_75 = arith.constant 0.797884583 : f32
      %147 = vector.broadcast %cst_75 : f32 to vector<8x128xf32>
      %148 = arith.mulf %147, %146 : vector<8x128xf32>
      %149 = math.tanh %148 : vector<8x128xf32>
      %cst_76 = arith.constant 1.000000e+00 : f32
      %150 = vector.broadcast %cst_76 : f32 to vector<8x128xf32>
      %151 = arith.addf %150, %149 : vector<8x128xf32>
      %cst_77 = arith.constant 5.000000e-01 : f32
      %152 = vector.broadcast %cst_77 : f32 to vector<8x128xf32>
      %153 = arith.mulf %152, %151 : vector<8x128xf32>
      %154 = arith.mulf %141, %153 : vector<8x128xf32>
      %155 = arith.truncf %154 : vector<8x128xf32> to vector<8x128xbf16>
      %c0_78 = arith.constant 0 : index
      %c0_79 = arith.constant 0 : index
      %156 = vector.load %arg18[%c0_78, %c0_79] : memref<128x32xbf16, #tpu.memory_space<vmem>>, vector<128x32xbf16>
      %cst_80 = arith.constant dense<0.000000e+00> : vector<8x32xf32>
      %157 = tpu.matmul %155, %156, %cst_80 {dimension_numbers = #tpu.dot_dimension_numbers<[1], [0], [0], [1], [0, 0, 1, 1], [], []>} : vector<8x128xbf16>, vector<128x32xbf16>, vector<8x32xf32> -> vector<8x32xf32>
      %158 = arith.addf %111, %157 : vector<8x32xf32>
      %c0_81 = arith.constant 0 : index
      %c0_82 = arith.constant 0 : index
      %159 = vector.load %arg19[%c0_81, %c0_82] : memref<1x32xf32, #tpu.memory_space<vmem>>, vector<1x32xf32>
      %160 = vector.broadcast %159 : vector<1x32xf32> to vector<8x32xf32>
      %161 = arith.addf %158, %160 : vector<8x32xf32>
      %c0_83 = arith.constant 0 : index
      %c0_84 = arith.constant 0 : index
      %c0_85 = arith.constant 0 : index
      %162 = vector.load %arg20[%c0_83, %c0_84, %c0_85] : memref<1x8x32xf32, #tpu.memory_space<vmem>>, vector<1x8x32xf32>
      %163 = vector.shape_cast %162 : vector<1x8x32xf32> to vector<8x32xf32>
      %164 = vector.shape_cast %161 : vector<8x32xf32> to vector<1x8x32xf32>
      tpu.vector_store %arg20[%c0_83, %c0_84, %c0_85], %164 {strides = array<i32>} : memref<1x8x32xf32, #tpu.memory_space<vmem>>, vector<1x8x32xf32>,
    } else {
    }
    return
  }
  func.func @transform_0(%arg0: i32, %arg1: i32, %arg2: i32) -> (i32, i32, i32) {
    %c0_i32 = arith.constant 0 : i32
    %c0_i32_0 = arith.constant 0 : i32
    return %arg0, %arg1, %c0_i32 : i32, i32, i32
  }
  func.func @transform_1(%arg0: i32, %arg1: i32, %arg2: i32) -> (i32, i32, i32) {
    %c0_i32 = arith.constant 0 : i32
    %c0_i32_0 = arith.constant 0 : i32
    return %arg0, %arg2, %c0_i32 : i32, i32, i32
  }
  func.func @transform_2(%arg0: i32, %arg1: i32, %arg2: i32) -> (i32, i32, i32) {
    %c0_i32 = arith.constant 0 : i32
    return %arg0, %arg1, %arg2 : i32, i32, i32
  }
  func.func @transform_3(%arg0: i32, %arg1: i32, %arg2: i32) -> (i32, i32) {
    %c0_i32 = arith.constant 0 : i32
    %c0_i32_0 = arith.constant 0 : i32
    %c0_i32_1 = arith.constant 0 : i32
    return %c0_i32, %c0_i32_0 : i32, i32
  }
  func.func @transform_4(%arg0: i32, %arg1: i32, %arg2: i32) -> (i32, i32) {
    %c0_i32 = arith.constant 0 : i32
    %c0_i32_0 = arith.constant 0 : i32
    %c0_i32_1 = arith.constant 0 : i32
    return %c0_i32, %c0_i32_0 : i32, i32
  }
  func.func @transform_5(%arg0: i32, %arg1: i32, %arg2: i32) -> (i32, i32) {
    %c0_i32 = arith.constant 0 : i32
    %c0_i32_0 = arith.constant 0 : i32
    %c0_i32_1 = arith.constant 0 : i32
    return %c0_i32, %c0_i32_0 : i32, i32
  }
  func.func @transform_6(%arg0: i32, %arg1: i32, %arg2: i32) -> (i32, i32) {
    %c0_i32 = arith.constant 0 : i32
    %c0_i32_0 = arith.constant 0 : i32
    %c0_i32_1 = arith.constant 0 : i32
    return %c0_i32, %c0_i32_0 : i32, i32
  }
  func.func @transform_7(%arg0: i32, %arg1: i32, %arg2: i32) -> (i32, i32) {
    %c0_i32 = arith.constant 0 : i32
    %c0_i32_0 = arith.constant 0 : i32
    %c0_i32_1 = arith.constant 0 : i32
    return %c0_i32, %c0_i32_0 : i32, i32
  }
  func.func @transform_8(%arg0: i32, %arg1: i32, %arg2: i32) -> (i32, i32) {
    %c0_i32 = arith.constant 0 : i32
    %c0_i32_0 = arith.constant 0 : i32
    %c0_i32_1 = arith.constant 0 : i32
    return %c0_i32, %c0_i32_0 : i32, i32
  }
  func.func @transform_9(%arg0: i32, %arg1: i32, %arg2: i32) -> (i32, i32) {
    %c0_i32 = arith.constant 0 : i32
    %c0_i32_0 = arith.constant 0 : i32
    %c0_i32_1 = arith.constant 0 : i32
    return %c0_i32, %c0_i32_0 : i32, i32
  }
  func.func @transform_10(%arg0: i32, %arg1: i32, %arg2: i32) -> (i32, i32) {
    %c0_i32 = arith.constant 0 : i32
    %c0_i32_0 = arith.constant 0 : i32
    %c0_i32_1 = arith.constant 0 : i32
    return %c0_i32, %c0_i32_0 : i32, i32
  }
  func.func @transform_11(%arg0: i32, %arg1: i32, %arg2: i32) -> (i32, i32) {
    %c0_i32 = arith.constant 0 : i32
    %c0_i32_0 = arith.constant 0 : i32
    %c0_i32_1 = arith.constant 0 : i32
    return %c0_i32, %c0_i32_0 : i32, i32
  }
  func.func @transform_12(%arg0: i32, %arg1: i32, %arg2: i32) -> (i32, i32) {
    %c0_i32 = arith.constant 0 : i32
    %c0_i32_0 = arith.constant 0 : i32
    %c0_i32_1 = arith.constant 0 : i32
    return %c0_i32, %c0_i32_0 : i32, i32
  }
  func.func @transform_13(%arg0: i32, %arg1: i32, %arg2: i32) -> (i32, i32) {
    %c0_i32 = arith.constant 0 : i32
    %c0_i32_0 = arith.constant 0 : i32
    %c0_i32_1 = arith.constant 0 : i32
    return %c0_i32, %c0_i32_0 : i32, i32
  }
  func.func @transform_14(%arg0: i32, %arg1: i32, %arg2: i32) -> (i32, i32) {
    %c0_i32 = arith.constant 0 : i32
    %c0_i32_0 = arith.constant 0 : i32
    %c0_i32_1 = arith.constant 0 : i32
    return %c0_i32, %c0_i32_0 : i32, i32
  }
  func.func @transform_15(%arg0: i32, %arg1: i32, %arg2: i32) -> (i32, i32) {
    %c0_i32 = arith.constant 0 : i32
    %c0_i32_0 = arith.constant 0 : i32
    %c0_i32_1 = arith.constant 0 : i32
    return %c0_i32, %c0_i32_0 : i32, i32
  }
  func.func @transform_16(%arg0: i32, %arg1: i32, %arg2: i32) -> (i32, i32) {
    %c0_i32 = arith.constant 0 : i32
    %c0_i32_0 = arith.constant 0 : i32
    %c0_i32_1 = arith.constant 0 : i32
    return %c0_i32, %c0_i32_0 : i32, i32
  }
  func.func @transform_17(%arg0: i32, %arg1: i32, %arg2: i32) -> (i32, i32, i32) {
    %c0_i32 = arith.constant 0 : i32
    %c0_i32_0 = arith.constant 0 : i32
    return %arg0, %arg1, %c0_i32 : i32, i32, i32
  }
}

</mosaic_0001>

<llo_original>
// kernel: tpu_custom_call.1
$region0: #{tpu_custom_call.1}
  #allocation0 [shape = 'u32[]', space=smem, size = 0x4, offset = 0x4, fixed_abs, tag = 'smem constant byte address 0x4 - core index']
  #allocation1 [shape = 'u32[144,128]{1,0:T(1,128)}', space=vmem, size = 0x12000, scoped, tag = 'internal scratch']
  #allocation2 [shape = 'bf16[4,8,8]{2,1,0:T(8,128)(2,1)}', space=vmem, size = 0x2000, scoped, tag = 'scratch operand']
  #allocation3 [shape = 'f32[4,8,1]{2,1,0:T(8,128)}', space=vmem, size = 0x4000, scoped, tag = 'scratch operand']
  #allocation4 [shape = 'f32[4,8,1]{2,1,0:T(8,128)}', space=vmem, size = 0x4000, scoped, tag = 'scratch operand']
  #allocation5 [shape = 'f32[4,8,8]{2,1,0:T(8,128)}', space=vmem, size = 0x4000, scoped, tag = 'scratch operand']
  %s0 = inlined_call_operand.vmem [shape: f32[2,8,32], index: 0, kind: input, shape index: {}]
  %s1 = inlined_call_operand.vmem [shape: f32[2,8,32], index: 1, kind: input, shape index: {}]
  %s2 = inlined_call_operand.vmem [shape: f32[2,8,8], index: 2, kind: input, shape index: {}]
  %s3 = inlined_call_operand.vmem [shape: f32[1,32], index: 3, kind: input, shape index: {}]
  %s4 = inlined_call_operand.hbm [shape: f32[1,32], index: 4, kind: input, shape index: {}]
  %s5 = inlined_call_operand.vmem [shape: bf16[32,32], index: 5, kind: input, shape index: {}]
  %s6 = inlined_call_operand.hbm [shape: f32[1,32], index: 6, kind: input, shape index: {}]
  %s7 = inlined_call_operand.vmem [shape: bf16[32,64], index: 7, kind: input, shape index: {}]
  %s8 = inlined_call_operand.hbm [shape: f32[1,64], index: 8, kind: input, shape index: {}]
  %s9 = inlined_call_operand.vmem [shape: bf16[32,32], index: 9, kind: input, shape index: {}]
  %s10 = inlined_call_operand.hbm [shape: f32[1,32], index: 10, kind: input, shape index: {}]
  %s11 = inlined_call_operand.hbm [shape: f32[1,32], index: 11, kind: input, shape index: {}]
  %s12 = inlined_call_operand.hbm [shape: f32[1,32], index: 12, kind: input, shape index: {}]
  %s13 = inlined_call_operand.vmem [shape: bf16[32,128], index: 13, kind: input, shape index: {}]
  %s14 = inlined_call_operand.vmem [shape: f32[1,128], index: 14, kind: input, shape index: {}]
  %s15 = inlined_call_operand.vmem [shape: bf16[128,32], index: 15, kind: input, shape index: {}]
  %s16 = inlined_call_operand.vmem [shape: f32[1,32], index: 16, kind: input, shape index: {}]
  %s17 = inlined_call_operand.hbm [shape: f32[2,8,32], index: 17, kind: output, shape index: {}]
  %s18 = sld [smem:[#allocation0]]
  $region133: #{tpu_custom_call.1} parent=0
    _
  %s20 = ssub.s32 1, %s18
  %s21 = scalar_select 0, %s20, %s18
  $region1: #{tpu_custom_call.1} parent=0
    #allocation6 [shape = 'u8[512]{0}', space=vmem, size = 0x400, scoped, tag = 'input window, operand 4, single buffered']
    #allocation7 [shape = 's32[2]{0}', space=sflag, size = 0x8, scoped, tag = 'scoped memory for tpu_custom_call.1']
    #allocation8 [shape = 's32[2]{0}', space=sflag, size = 0x8, scoped, tag = 'scoped memory for tpu_custom_call.1']
    #allocation9 [shape = 'u8[512]{0}', space=vmem, size = 0x400, scoped, tag = 'input window, operand 6, single buffered']
    #allocation10 [shape = 's32[1]{0}', space=sflag, size = 0x4, scoped, tag = 'scoped memory for tpu_custom_call.1']
    #allocation11 [shape = 'u8[512]{0}', space=vmem, size = 0x400, scoped, tag = 'input window, operand 8, single buffered']
    #allocation12 [shape = 'u8[512]{0}', space=vmem, size = 0x400, scoped, tag = 'input window, operand 10, single buffered']
    #allocation13 [shape = 's32[1]{0}', space=sflag, size = 0x4, scoped, tag = 'scoped memory for tpu_custom_call.1']
    #allocation14 [shape = 'u8[512]{0}', space=vmem, size = 0x400, scoped, tag = 'input window, operand 11, single buffered']
    #allocation15 [shape = 'u8[512]{0}', space=vmem, size = 0x400, scoped, tag = 'input window, operand 12, single buffered']
    #allocation16 [shape = 's32[1]{0}', space=sflag, size = 0x4, scoped, tag = 'scoped memory for tpu_custom_call.1']
    #allocation17 [shape = 'u8[8192]{0}', space=vmem, size = 0x2000, scoped, tag = 'output window, operand 0']
    %22 = vsyncpa [#allocation7], 0
    %23 = vsyncpa [#allocation10], 0
    %24 = vsyncpa [#allocation13], 0
    %25 = vsyncpa [#allocation16], 0
    %26 = vsyncpa [#allocation8], 0
    %s27 = scalar_lea.sflag [#allocation8], 1
    %28 = vsyncpa %s27, 0
    loop: start=0, step=1, limit=4
    $region2: #{tpu_custom_call.1} parent=1 // loop_pre_header
      _
    $region3: #{tpu_custom_call.1} parent=1 // loop_header
      %s30 = sphi 0, %s34
      %p31 = scmp.ge.s32.totalorder %s30, 4
      %s37 = sphi 0, %s56
      %s38 = sphi 0, %s52
      %s39 = sphi 0, %s48
      %s40 = sphi 0, %s37
      %s41 = sphi 0, %s38
      %s42 = sphi 0, %s39
      %s43 = sphi 0, %s40
      %s44 = sphi 0, %s41
      %s45 = sphi 0, %s42
      %s61 = sphi 0, %s63
      %s64 = sphi 0, %s61
      %s65 = sphi 0, %s64
      %s81 = sphi 0, %s65
      %s89 = sphi 0, %s91
      %s92 = sphi 0, %s89
      %s93 = sphi 0, %s92
      %s109 = sphi 0, %s93
      %s119 = sphi 0, %s121
      %s122 = sphi 0, %s119
      %s123 = sphi 0, %s122
      %s139 = sphi 0, %s123
      %s143 = sphi 0, %s143
      %s145 = sphi 0, %s143
      %s146 = sphi 0, %s145
      %s160 = sphi 0, %s146
      %s164 = sphi 0, %s164
      %s166 = sphi 0, %s164
      %s167 = sphi 0, %s166
      %s181 = sphi 0, %s167
      %s185 = sphi 0, %s185
      %s187 = sphi 0, %s185
      %s188 = sphi 0, %s187
      %s202 = sphi 0, %s188
      %s206 = sphi 0, %s206
      %s208 = sphi 0, %s206
      %s209 = sphi 0, %s208
      %s223 = sphi 0, %s209
      %s227 = sphi 0, %s227
      %s229 = sphi 0, %s227
      %s230 = sphi 0, %s229
      %s244 = sphi 0, %s230
      %s248 = sphi 0, %s248
      %s250 = sphi 0, %s248
      %s251 = sphi 0, %s250
      %s265 = sphi 0, %s251
      %s269 = sphi 0, %s269
      %s271 = sphi 0, %s269
      %s272 = sphi 0, %s271
      %s286 = sphi 0, %s272
      %s290 = sphi 0, %s290
      %s292 = sphi 0, %s290
      %s293 = sphi 0, %s292
      %s307 = sphi 0, %s293
      %s311 = sphi 0, %s311
      %s313 = sphi 0, %s311
      %s314 = sphi 0, %s313
      %s328 = sphi 0, %s314
      %s332 = sphi 0, %s332
      %s334 = sphi 0, %s332
      %s335 = sphi 0, %s334
      %s349 = sphi 0, %s335
      %s353 = sphi 0, %s353
      %s355 = sphi 0, %s353
      %s356 = sphi 0, %s355
      %s370 = sphi 0, %s356
      %s374 = sphi 0, %s374
      %s376 = sphi 0, %s374
      %s377 = sphi 0, %s376
      %s391 = sphi 0, %s377
      %s395 = sphi 0, %s395
      %s397 = sphi 0, %s395
      %s398 = sphi 0, %s397
      %s412 = sphi 0, %s398
      %s416 = sphi 0, %s416
      %s418 = sphi 0, %s416
      %s419 = sphi 0, %s418
      %s433 = sphi 0, %s419
      %s441 = sphi 0, %s443
      %s444 = sphi 0, %s441
      %s445 = sphi 0, %s444
      %s461 = sphi 0, %s445
    $region4: #{tpu_custom_call.1} parent=1 // loop_header_branch
      %33 = sbr.rel (%p31) target = $region8
    $region5: #{tpu_custom_call.1} parent=1 // loop_body
      %s35 = ssub.s32 %s30, 1
      %s36 = ssub.s32 %s30, 2
      %s46 = sadd.s32 1, %s39
      %p47 = scmp.ge.s32.totalorder %s46, 1
      %s48 = scalar_select %p47, 0, %s46
      %s49 = sadd.s32 1, %s38
      %s50 = scalar_select %p47, %s49, %s38
      %p51 = scmp.ge.s32.totalorder %s50, 1
      %s52 = scalar_select %p51, 0, %s50
      %s53 = sadd.s32 1, %s37
      %s54 = scalar_select %p51, %s53, %s37
      %p55 = scmp.ge.s32.totalorder %s54, 2
      %s56 = scalar_select %p55, 0, %s54
      %s57 = ssub.s32 %s37, %s56
      %s58 = ssub.s32 %s38, %s52
      %s59 = sor.u32 %s57, %s58
      %p60 = scmp.eq.s32.totalorder %s59, 0
      %s62 = sadd.s32 %s61, 1
      %s63 = scalar_select %p60, %s61, %s62
      %p66 = pneg %p60
      %p67 = scmp.eq.s32.totalorder %s30, 1
      %p68 = por %p66, %p67
      %p69 = scmp.ne.s32.totalorder %s61, %s64
      %p70 = scmp.eq.s32.totalorder %s30, 0
      %p71 = por %p69, %p70
      %p72 = scmp.ne.s32.totalorder %s61, %s64
      %p73 = scmp.eq.s32.totalorder %s35, 1
      %p74 = por %p72, %p73
      %p75 = scmp.ne.s32.totalorder %s64, %s65
      %p76 = scmp.eq.s32.totalorder %s35, 0
      %p77 = por %p75, %p76
      %p78 = scmp.ne.s32.totalorder %s64, %s65
      %p79 = scmp.eq.s32.totalorder %s36, 1
      %p80 = por %p78, %p79
      %p82 = scmp.ne.s32.totalorder %s65, %s81
      %p83 = scmp.eq.s32.totalorder %s36, 0
      %p84 = por %p82, %p83
      %s85 = ssub.s32 %s37, %s56
      %s86 = ssub.s32 %s39, %s48
      %s87 = sor.u32 %s85, %s86
      %p88 = scmp.eq.s32.totalorder %s87, 0
      %s90 = sadd.s32 %s89, 1
      %s91 = scalar_select %p88, %s89, %s90
      %p94 = pneg %p88
      %p95 = scmp.eq.s32.totalorder %s30, 1
      %p96 = por %p94, %p95
      %p97 = scmp.ne.s32.totalorder %s89, %s92
      %p98 = scmp.eq.s32.totalorder %s30, 0
      %p99 = por %p97, %p98
      %p100 = scmp.ne.s32.totalorder %s89, %s92
      %p101 = scmp.eq.s32.totalorder %s35, 1
      %p102 = por %p100, %p101
      %p103 = scmp.ne.s32.totalorder %s92, %s93
      %p104 = scmp.eq.s32.totalorder %s35, 0
      %p105 = por %p103, %p104
      %p106 = scmp.ne.s32.totalorder %s92, %s93
      %p107 = scmp.eq.s32.totalorder %s36, 1
      %p108 = por %p106, %p107
      %p110 = scmp.ne.s32.totalorder %s93, %s109
      %p111 = scmp.eq.s32.totalorder %s36, 0
      %p112 = por %p110, %p111
      %s113 = ssub.s32 %s37, %s56
      %s114 = ssub.s32 %s38, %s52
      %s115 = sor.u32 %s113, %s114
      %s116 = ssub.s32 %s39, %s48
      %s117 = sor.u32 %s115, %s116
      %p118 = scmp.eq.s32.totalorder %s117, 0
      %s120 = sadd.s32 %s119, 1
      %s121 = scalar_select %p118, %s119, %s120
      %p124 = pneg %p118
      %p125 = scmp.eq.s32.totalorder %s30, 1
      %p126 = por %p124, %p125
      %p127 = scmp.ne.s32.totalorder %s119, %s122
      %p128 = scmp.eq.s32.totalorder %s30, 0
      %p129 = por %p127, %p128
      %p130 = scmp.ne.s32.totalorder %s119, %s122
      %p131 = scmp.eq.s32.totalorder %s35, 1
      %p132 = por %p130, %p131
      %p133 = scmp.ne.s32.totalorder %s122, %s123
      %p134 = scmp.eq.s32.totalorder %s35, 0
      %p135 = por %p133, %p134
      %p136 = scmp.ne.s32.totalorder %s122, %s123
      %p137 = scmp.eq.s32.totalorder %s36, 1
      %p138 = por %p136, %p137
      %p140 = scmp.ne.s32.totalorder %s123, %s139
      %p141 = scmp.eq.s32.totalorder %s36, 0
      %p142 = por %p140, %p141
      %s144 = sadd.s32 %s143, 1
      %p147 = scmp.eq.s32.totalorder %s30, 1
      %p148 = scmp.ne.s32.totalorder %s143, %s145
      %p149 = scmp.eq.s32.totalorder %s30, 0
      %p150 = por %p148, %p149
      %p151 = scmp.ne.s32.totalorder %s143, %s145
      %p152 = scmp.eq.s32.totalorder %s35, 1
      %p153 = por %p151, %p152
      %p154 = scmp.ne.s32.totalorder %s145, %s146
      %p155 = scmp.eq.s32.totalorder %s35, 0
      %p156 = por %p154, %p155
      %p157 = scmp.ne.s32.totalorder %s145, %s146
      %p158 = scmp.eq.s32.totalorder %s36, 1
      %p159 = por %p157, %p158
      %p161 = scmp.ne.s32.totalorder %s146, %s160
      %p162 = scmp.eq.s32.totalorder %s36, 0
      %p163 = por %p161, %p162
      %s165 = sadd.s32 %s164, 1
      %p168 = scmp.eq.s32.totalorder %s30, 1
      %p169 = scmp.ne.s32.totalorder %s164, %s166
      %p170 = scmp.eq.s32.totalorder %s30, 0
      %p171 = por %p169, %p170
      %p172 = scmp.ne.s32.totalorder %s164, %s166
      %p173 = scmp.eq.s32.totalorder %s35, 1
      %p174 = por %p172, %p173
      %p175 = scmp.ne.s32.totalorder %s166, %s167
      %p176 = scmp.eq.s32.totalorder %s35, 0
      %p177 = por %p175, %p176
      %p178 = scmp.ne.s32.totalorder %s166, %s167
      %p179 = scmp.eq.s32.totalorder %s36, 1
      %p180 = por %p178, %p179
      %p182 = scmp.ne.s32.totalorder %s167, %s181
      %p183 = scmp.eq.s32.totalorder %s36, 0
      %p184 = por %p182, %p183
      %s186 = sadd.s32 %s185, 1
      %p189 = scmp.eq.s32.totalorder %s30, 1
      %p190 = scmp.ne.s32.totalorder %s185, %s187
      %p191 = scmp.eq.s32.totalorder %s30, 0
      %p192 = por %p190, %p191
      %p193 = scmp.ne.s32.totalorder %s185, %s187
      %p194 = scmp.eq.s32.totalorder %s35, 1
      %p195 = por %p193, %p194
      %p196 = scmp.ne.s32.totalorder %s187, %s188
      %p197 = scmp.eq.s32.totalorder %s35, 0
      %p198 = por %p196, %p197
      %p199 = scmp.ne.s32.totalorder %s187, %s188
      %p200 = scmp.eq.s32.totalorder %s36, 1
      %p201 = por %p199, %p200
      %p203 = scmp.ne.s32.totalorder %s188, %s202
      %p204 = scmp.eq.s32.totalorder %s36, 0
      %p205 = por %p203, %p204
      %s207 = sadd.s32 %s206, 1
      %p210 = scmp.eq.s32.totalorder %s30, 1
      %p211 = scmp.ne.s32.totalorder %s206, %s208
      %p212 = scmp.eq.s32.totalorder %s30, 0
      %p213 = por %p211, %p212
      %p214 = scmp.ne.s32.totalorder %s206, %s208
      %p215 = scmp.eq.s32.totalorder %s35, 1
      %p216 = por %p214, %p215
      %p217 = scmp.ne.s32.totalorder %s208, %s209
      %p218 = scmp.eq.s32.totalorder %s35, 0
      %p219 = por %p217, %p218
      %p220 = scmp.ne.s32.totalorder %s208, %s209
      %p221 = scmp.eq.s32.totalorder %s36, 1
      %p222 = por %p220, %p221
      %p224 = scmp.ne.s32.totalorder %s209, %s223
      %p225 = scmp.eq.s32.totalorder %s36, 0
      %p226 = por %p224, %p225
      %s228 = sadd.s32 %s227, 1
      %p231 = scmp.eq.s32.totalorder %s30, 1
      %p232 = scmp.ne.s32.totalorder %s227, %s229
      %p233 = scmp.eq.s32.totalorder %s30, 0
      %p234 = por %p232, %p233
      %p235 = scmp.ne.s32.totalorder %s227, %s229
      %p236 = scmp.eq.s32.totalorder %s35, 1
      %p237 = por %p235, %p236
      %p238 = scmp.ne.s32.totalorder %s229, %s230
      %p239 = scmp.eq.s32.totalorder %s35, 0
      %p240 = por %p238, %p239
      %p241 = scmp.ne.s32.totalorder %s229, %s230
      %p242 = scmp.eq.s32.totalorder %s36, 1
      %p243 = por %p241, %p242
      %p245 = scmp.ne.s32.totalorder %s230, %s244
      %p246 = scmp.eq.s32.totalorder %s36, 0
      %p247 = por %p245, %p246
      %s249 = sadd.s32 %s248, 1
      %p252 = scmp.eq.s32.totalorder %s30, 1
      %p253 = scmp.ne.s32.totalorder %s248, %s250
      %p254 = scmp.eq.s32.totalorder %s30, 0
      %p255 = por %p253, %p254
      %p256 = scmp.ne.s32.totalorder %s248, %s250
      %p257 = scmp.eq.s32.totalorder %s35, 1
      %p258 = por %p256, %p257
      %p259 = scmp.ne.s32.totalorder %s250, %s251
      %p260 = scmp.eq.s32.totalorder %s35, 0
      %p261 = por %p259, %p260
      %p262 = scmp.ne.s32.totalorder %s250, %s251
      %p263 = scmp.eq.s32.totalorder %s36, 1
      %p264 = por %p262, %p263
      %p266 = scmp.ne.s32.totalorder %s251, %s265
      %p267 = scmp.eq.s32.totalorder %s36, 0
      %p268 = por %p266, %p267
      %s270 = sadd.s32 %s269, 1
      %p273 = scmp.eq.s32.totalorder %s30, 1
      %p274 = scmp.ne.s32.totalorder %s269, %s271
      %p275 = scmp.eq.s32.totalorder %s30, 0
      %p276 = por %p274, %p275
      %p277 = scmp.ne.s32.totalorder %s269, %s271
      %p278 = scmp.eq.s32.totalorder %s35, 1
      %p279 = por %p277, %p278
      %p280 = scmp.ne.s32.totalorder %s271, %s272
      %p281 = scmp.eq.s32.totalorder %s35, 0
      %p282 = por %p280, %p281
      %p283 = scmp.ne.s32.totalorder %s271, %s272
      %p284 = scmp.eq.s32.totalorder %s36, 1
      %p285 = por %p283, %p284
      %p287 = scmp.ne.s32.totalorder %s272, %s286
      %p288 = scmp.eq.s32.totalorder %s36, 0
      %p289 = por %p287, %p288
      %s291 = sadd.s32 %s290, 1
      %p294 = scmp.eq.s32.totalorder %s30, 1
      %p295 = scmp.ne.s32.totalorder %s290, %s292
      %p296 = scmp.eq.s32.totalorder %s30, 0
      %p297 = por %p295, %p296
      %p298 = scmp.ne.s32.totalorder %s290, %s292
      %p299 = scmp.eq.s32.totalorder %s35, 1
      %p300 = por %p298, %p299
      %p301 = scmp.ne.s32.totalorder %s292, %s293
      %p302 = scmp.eq.s32.totalorder %s35, 0
      %p303 = por %p301, %p302
      %p304 = scmp.ne.s32.totalorder %s292, %s293
      %p305 = scmp.eq.s32.totalorder %s36, 1
      %p306 = por %p304, %p305
      %p308 = scmp.ne.s32.totalorder %s293, %s307
      %p309 = scmp.eq.s32.totalorder %s36, 0
      %p310 = por %p308, %p309
      %s312 = sadd.s32 %s311, 1
      %p315 = scmp.eq.s32.totalorder %s30, 1
      %p316 = scmp.ne.s32.totalorder %s311, %s313
      %p317 = scmp.eq.s32.totalorder %s30, 0
      %p318 = por %p316, %p317
      %p319 = scmp.ne.s32.totalorder %s311, %s313
      %p320 = scmp.eq.s32.totalorder %s35, 1
      %p321 = por %p319, %p320
      %p322 = scmp.ne.s32.totalorder %s313, %s314
      %p323 = scmp.eq.s32.totalorder %s35, 0
      %p324 = por %p322, %p323
      %p325 = scmp.ne.s32.totalorder %s313, %s314
      %p326 = scmp.eq.s32.totalorder %s36, 1
      %p327 = por %p325, %p326
      %p329 = scmp.ne.s32.totalorder %s314, %s328
      %p330 = scmp.eq.s32.totalorder %s36, 0
      %p331 = por %p329, %p330
      %s333 = sadd.s32 %s332, 1
      %p336 = scmp.eq.s32.totalorder %s30, 1
      %p337 = scmp.ne.s32.totalorder %s332, %s334
      %p338 = scmp.eq.s32.totalorder %s30, 0
      %p339 = por %p337, %p338
      %p340 = scmp.ne.s32.totalorder %s332, %s334
      %p341 = scmp.eq.s32.totalorder %s35, 1
      %p342 = por %p340, %p341
      %p343 = scmp.ne.s32.totalorder %s334, %s335
      %p344 = scmp.eq.s32.totalorder %s35, 0
      %p345 = por %p343, %p344
      %p346 = scmp.ne.s32.totalorder %s334, %s335
      %p347 = scmp.eq.s32.totalorder %s36, 1
      %p348 = por %p346, %p347
      %p350 = scmp.ne.s32.totalorder %s335, %s349
      %p351 = scmp.eq.s32.totalorder %s36, 0
      %p352 = por %p350, %p351
      %s354 = sadd.s32 %s353, 1
      %p357 = scmp.eq.s32.totalorder %s30, 1
      %p358 = scmp.ne.s32.totalorder %s353, %s355
      %p359 = scmp.eq.s32.totalorder %s30, 0
      %p360 = por %p358, %p359
      %p361 = scmp.ne.s32.totalorder %s353, %s355
      %p362 = scmp.eq.s32.totalorder %s35, 1
      %p363 = por %p361, %p362
      %p364 = scmp.ne.s32.totalorder %s355, %s356
      %p365 = scmp.eq.s32.totalorder %s35, 0
      %p366 = por %p364, %p365
      %p367 = scmp.ne.s32.totalorder %s355, %s356
      %p368 = scmp.eq.s32.totalorder %s36, 1
      %p369 = por %p367, %p368
      %p371 = scmp.ne.s32.totalorder %s356, %s370
      %p372 = scmp.eq.s32.totalorder %s36, 0
      %p373 = por %p371, %p372
      %s375 = sadd.s32 %s374, 1
      %p378 = scmp.eq.s32.totalorder %s30, 1
      %p379 = scmp.ne.s32.totalorder %s374, %s376
      %p380 = scmp.eq.s32.totalorder %s30, 0
      %p381 = por %p379, %p380
      %p382 = scmp.ne.s32.totalorder %s374, %s376
      %p383 = scmp.eq.s32.totalorder %s35, 1
      %p384 = por %p382, %p383
      %p385 = scmp.ne.s32.totalorder %s376, %s377
      %p386 = scmp.eq.s32.totalorder %s35, 0
      %p387 = por %p385, %p386
      %p388 = scmp.ne.s32.totalorder %s376, %s377
      %p389 = scmp.eq.s32.totalorder %s36, 1
      %p390 = por %p388, %p389
      %p392 = scmp.ne.s32.totalorder %s377, %s391
      %p393 = scmp.eq.s32.totalorder %s36, 0
      %p394 = por %p392, %p393
      %s396 = sadd.s32 %s395, 1
      %p399 = scmp.eq.s32.totalorder %s30, 1
      %p400 = scmp.ne.s32.totalorder %s395, %s397
      %p401 = scmp.eq.s32.totalorder %s30, 0
      %p402 = por %p400, %p401
      %p403 = scmp.ne.s32.totalorder %s395, %s397
      %p404 = scmp.eq.s32.totalorder %s35, 1
      %p405 = por %p403, %p404
      %p406 = scmp.ne.s32.totalorder %s397, %s398
      %p407 = scmp.eq.s32.totalorder %s35, 0
      %p408 = por %p406, %p407
      %p409 = scmp.ne.s32.totalorder %s397, %s398
      %p410 = scmp.eq.s32.totalorder %s36, 1
      %p411 = por %p409, %p410
      %p413 = scmp.ne.s32.totalorder %s398, %s412
      %p414 = scmp.eq.s32.totalorder %s36, 0
      %p415 = por %p413, %p414
      %s417 = sadd.s32 %s416, 1
      %p420 = scmp.eq.s32.totalorder %s30, 1
      %p421 = scmp.ne.s32.totalorder %s416, %s418
      %p422 = scmp.eq.s32.totalorder %s30, 0
      %p423 = por %p421, %p422
      %p424 = scmp.ne.s32.totalorder %s416, %s418
      %p425 = scmp.eq.s32.totalorder %s35, 1
      %p426 = por %p424, %p425
      %p427 = scmp.ne.s32.totalorder %s418, %s419
      %p428 = scmp.eq.s32.totalorder %s35, 0
      %p429 = por %p427, %p428
      %p430 = scmp.ne.s32.totalorder %s418, %s419
      %p431 = scmp.eq.s32.totalorder %s36, 1
      %p432 = por %p430, %p431
      %p434 = scmp.ne.s32.totalorder %s419, %s433
      %p435 = scmp.eq.s32.totalorder %s36, 0
      %p436 = por %p434, %p435
      %s437 = ssub.s32 %s37, %s56
      %s438 = ssub.s32 %s38, %s52
      %s439 = sor.u32 %s437, %s438
      %p440 = scmp.eq.s32.totalorder %s439, 0
      %s442 = sadd.s32 %s441, 1
      %s443 = scalar_select %p440, %s441, %s442
      %p446 = pneg %p440
      %p447 = scmp.eq.s32.totalorder %s30, 1
      %p448 = por %p446, %p447
      %p449 = scmp.ne.s32.totalorder %s441, %s444
      %p450 = scmp.eq.s32.totalorder %s30, 0
      %p451 = por %p449, %p450
      %p452 = scmp.ne.s32.totalorder %s441, %s444
      %p453 = scmp.eq.s32.totalorder %s35, 1
      %p454 = por %p452, %p453
      %p455 = scmp.ne.s32.totalorder %s444, %s445
      %p456 = scmp.eq.s32.totalorder %s35, 0
      %p457 = por %p455, %p456
      %p458 = scmp.ne.s32.totalorder %s444, %s445
      %p459 = scmp.eq.s32.totalorder %s36, 1
      %p460 = por %p458, %p459
      %p462 = scmp.ne.s32.totalorder %s445, %s461
      %p463 = scmp.eq.s32.totalorder %s36, 0
      %p464 = por %p462, %p463
      %p465 = scmp.le.s32.totalorder 1, %s30
      %p466 = scmp.lt.s32.totalorder %s30, 3
      %p467 = pnand %p465, %p466
      %p468 = pneg %p467
      // Predicated region
      $region9: #{tpu_custom_call.1} parent=5 // pred_check
        _
      $region10: #{tpu_custom_call.1} parent=5 // pred_check_branch
        %470 = sbr.rel (%p467) target = $region12
      $region11: #{tpu_custom_call.1} parent=5 // pred_region
        %s471 = ssub.s32 %s30, 1
        // Predicated region
        $region13: #{tpu_custom_call.1} parent=11 // pred_check
          %p472 = pneg %p156
        $region14: #{tpu_custom_call.1} parent=11 // pred_check_branch
          %474 = sbr.rel (%p472) target = $region16
        $region15: #{tpu_custom_call.1} parent=11 // pred_region
          _
        $region16: #{tpu_custom_call.1} parent=11 // pred_fallthru
          _
        // Predicated region
        $region17: #{tpu_custom_call.1} parent=11 // pred_check
          %p475 = pneg %p177
        $region18: #{tpu_custom_call.1} parent=11 // pred_check_branch
          %477 = sbr.rel (%p475) target = $region20
        $region19: #{tpu_custom_call.1} parent=11 // pred_region
          %s479 = ssub.s32 16, 16
          %480 = vsyncadd [#allocation7], %s479
          %s482 = sshll.u32 [#allocation6], 4
          %s483 = int_to_ptr.vmem [resolvable:$true] %s482
          %485 = dma.hbm_to_vmem [thread:$0]  %s4, 16, %s483, [#allocation7]
        $region20: #{tpu_custom_call.1} parent=11 // pred_fallthru
          _
        // Predicated region
        $region21: #{tpu_custom_call.1} parent=11 // pred_check
          %p486 = pneg %p198
        $region22: #{tpu_custom_call.1} parent=11 // pred_check_branch
          %488 = sbr.rel (%p486) target = $region24
        $region23: #{tpu_custom_call.1} parent=11 // pred_region
          _
        $region24: #{tpu_custom_call.1} parent=11 // pred_fallthru
          _
        // Predicated region
        $region25: #{tpu_custom_call.1} parent=11 // pred_check
          %p489 = pneg %p219
        $region26: #{tpu_custom_call.1} parent=11 // pred_check_branch
          %491 = sbr.rel (%p489) target = $region28
        $region27: #{tpu_custom_call.1} parent=11 // pred_region
          %s493 = ssub.s32 16, 16
          %494 = vsyncadd [#allocation10], %s493
          %s496 = sshll.u32 [#allocation9], 4
          %s497 = int_to_ptr.vmem [resolvable:$true] %s496
          %499 = dma.hbm_to_vmem [thread:$0]  %s6, 16, %s497, [#allocation10]
        $region28: #{tpu_custom_call.1} parent=11 // pred_fallthru
          _
        // Predicated region
        $region29: #{tpu_custom_call.1} parent=11 // pred_check
          %p500 = pneg %p240
        $region30: #{tpu_custom_call.1} parent=11 // pred_check_branch
          %502 = sbr.rel (%p500) target = $region32
        $region31: #{tpu_custom_call.1} parent=11 // pred_region
          _
        $region32: #{tpu_custom_call.1} parent=11 // pred_fallthru
          _
        // Predicated region
        $region33: #{tpu_custom_call.1} parent=11 // pred_check
          %p503 = pneg %p261
        $region34: #{tpu_custom_call.1} parent=11 // pred_check_branch
          %505 = sbr.rel (%p503) target = $region36
        $region35: #{tpu_custom_call.1} parent=11 // pred_region
          %s507 = ssub.s32 16, 16
          %508 = vsyncadd [#allocation10], %s507
          %s510 = sshll.u32 [#allocation11], 4
          %s511 = int_to_ptr.vmem [resolvable:$true] %s510
          %513 = dma.hbm_to_vmem [thread:$0]  %s8, 16, %s511, [#allocation10]
        $region36: #{tpu_custom_call.1} parent=11 // pred_fallthru
          _
        // Predicated region
        $region37: #{tpu_custom_call.1} parent=11 // pred_check
          %p514 = pneg %p282
        $region38: #{tpu_custom_call.1} parent=11 // pred_check_branch
          %516 = sbr.rel (%p514) target = $region40
        $region39: #{tpu_custom_call.1} parent=11 // pred_region
          _
        $region40: #{tpu_custom_call.1} parent=11 // pred_fallthru
          _
        // Predicated region
        $region41: #{tpu_custom_call.1} parent=11 // pred_check
          %p517 = pneg %p303
        $region42: #{tpu_custom_call.1} parent=11 // pred_check_branch
          %519 = sbr.rel (%p517) target = $region44
        $region43: #{tpu_custom_call.1} parent=11 // pred_region
          %s521 = ssub.s32 16, 16
          %522 = vsyncadd [#allocation13], %s521
          %s524 = sshll.u32 [#allocation12], 4
          %s525 = int_to_ptr.vmem [resolvable:$true] %s524
          %527 = dma.hbm_to_vmem [thread:$0]  %s10, 16, %s525, [#allocation13]
        $region44: #{tpu_custom_call.1} parent=11 // pred_fallthru
          _
        // Predicated region
        $region45: #{tpu_custom_call.1} parent=11 // pred_check
          %p528 = pneg %p324
        $region46: #{tpu_custom_call.1} parent=11 // pred_check_branch
          %530 = sbr.rel (%p528) target = $region48
        $region47: #{tpu_custom_call.1} parent=11 // pred_region
          %s532 = ssub.s32 16, 16
          %533 = vsyncadd [#allocation13], %s532
          %s535 = sshll.u32 [#allocation14], 4
          %s536 = int_to_ptr.vmem [resolvable:$true] %s535
          %538 = dma.hbm_to_vmem [thread:$0]  %s11, 16, %s536, [#allocation13]
        $region48: #{tpu_custom_call.1} parent=11 // pred_fallthru
          _
        // Predicated region
        $region49: #{tpu_custom_call.1} parent=11 // pred_check
          %p539 = pneg %p345
        $region50: #{tpu_custom_call.1} parent=11 // pred_check_branch
          %541 = sbr.rel (%p539) target = $region52
        $region51: #{tpu_custom_call.1} parent=11 // pred_region
          %s543 = ssub.s32 16, 16
          %544 = vsyncadd [#allocation16], %s543
          %s546 = sshll.u32 [#allocation15], 4
          %s547 = int_to_ptr.vmem [resolvable:$true] %s546
          %549 = dma.hbm_to_vmem [thread:$0]  %s12, 16, %s547, [#allocation16]
        $region52: #{tpu_custom_call.1} parent=11 // pred_fallthru
          _
        // Predicated region
        $region53: #{tpu_custom_call.1} parent=11 // pred_check
          %p550 = pneg %p366
        $region54: #{tpu_custom_call.1} parent=11 // pred_check_branch
          %552 = sbr.rel (%p550) target = $region56
        $region55: #{tpu_custom_call.1} parent=11 // pred_region
          _
        $region56: #{tpu_custom_call.1} parent=11 // pred_fallthru
          _
        // Predicated region
        $region57: #{tpu_custom_call.1} parent=11 // pred_check
          %p553 = pneg %p387
        $region58: #{tpu_custom_call.1} parent=11 // pred_check_branch
          %555 = sbr.rel (%p553) target = $region60
        $region59: #{tpu_custom_call.1} parent=11 // pred_region
          _
        $region60: #{tpu_custom_call.1} parent=11 // pred_fallthru
          _
        // Predicated region
        $region61: #{tpu_custom_call.1} parent=11 // pred_check
          %p556 = pneg %p408
        $region62: #{tpu_custom_call.1} parent=11 // pred_check_branch
          %558 = sbr.rel (%p556) target = $region64
        $region63: #{tpu_custom_call.1} parent=11 // pred_region
          _
        $region64: #{tpu_custom_call.1} parent=11 // pred_fallthru
          _
        // Predicated region
        $region65: #{tpu_custom_call.1} parent=11 // pred_check
          %p559 = pneg %p429
        $region66: #{tpu_custom_call.1} parent=11 // pred_check_branch
          %561 = sbr.rel (%p559) target = $region68
        $region67: #{tpu_custom_call.1} parent=11 // pred_region
          _
        $region68: #{tpu_custom_call.1} parent=11 // pred_fallthru
          _
      $region12: #{tpu_custom_call.1} parent=5 // pred_fallthru
        _
      %p562 = scmp.lt.s32.totalorder %s30, 2
      // Predicated region
      $region69: #{tpu_custom_call.1} parent=5 // pred_check
        %p563 = pneg %p562
      $region70: #{tpu_custom_call.1} parent=5 // pred_check_branch
        %565 = sbr.rel (%p563) target = $region72
      $region71: #{tpu_custom_call.1} parent=5 // pred_region
        // Predicated region
        $region73: #{tpu_custom_call.1} parent=71 // pred_check
          %p566 = pneg %p71
        $region74: #{tpu_custom_call.1} parent=71 // pred_check_branch
          %568 = sbr.rel (%p566) target = $region76
        $region75: #{tpu_custom_call.1} parent=71 // pred_region
          %p569 = scmp.lt.s32.totalorder %s37, 1
          %s570 = scalar_select %p569, %s37, 1
          %p571 = scmp.lt.s32.totalorder %s38, 0
          %s572 = scalar_select %p571, %s38, 0
          %s573 = sadd.s32 %s572, %s570
          %s574 = smul.addr %s573, 8
          %s575 = scalar_lea.vmem %s0, %s574
        $region76: #{tpu_custom_call.1} parent=71 // pred_fallthru
          _
        // Predicated region
        $region77: #{tpu_custom_call.1} parent=71 // pred_check
          %p576 = pneg %p99
        $region78: #{tpu_custom_call.1} parent=71 // pred_check_branch
          %578 = sbr.rel (%p576) target = $region80
        $region79: #{tpu_custom_call.1} parent=71 // pred_region
          %p579 = scmp.lt.s32.totalorder %s37, 1
          %s580 = scalar_select %p579, %s37, 1
          %p581 = scmp.lt.s32.totalorder %s39, 0
          %s582 = scalar_select %p581, %s39, 0
          %s583 = sadd.s32 %s582, %s580
          %s584 = smul.addr %s583, 8
          %s585 = scalar_lea.vmem %s1, %s584
        $region80: #{tpu_custom_call.1} parent=71 // pred_fallthru
          _
        // Predicated region
        $region81: #{tpu_custom_call.1} parent=71 // pred_check
          %p586 = pneg %p129
        $region82: #{tpu_custom_call.1} parent=71 // pred_check_branch
          %588 = sbr.rel (%p586) target = $region84
        $region83: #{tpu_custom_call.1} parent=71 // pred_region
          %p589 = scmp.lt.s32.totalorder %s37, 1
          %s590 = scalar_select %p589, %s37, 1
          %p591 = scmp.lt.s32.totalorder %s38, 0
          %s592 = scalar_select %p591, %s38, 0
          %p593 = scmp.lt.s32.totalorder %s39, 0
          %s594 = scalar_select %p593, %s39, 0
          %s595 = sadd.s32 %s594, %s592
          %s596 = sadd.s32 %s595, %s590
          %s597 = smul.addr %s596, 8
          %s598 = scalar_lea.vmem %s2, %s597
        $region84: #{tpu_custom_call.1} parent=71 // pred_fallthru
          _
      $region72: #{tpu_custom_call.1} parent=5 // pred_fallthru
        _
      %p599 = scmp.le.s32.totalorder 1, %s30
      %p600 = scmp.lt.s32.totalorder %s30, 3
      %p601 = pnand %p599, %p600
      %p602 = pneg %p601
      // Predicated region
      $region85: #{tpu_custom_call.1} parent=5 // pred_check
        _
      $region86: #{tpu_custom_call.1} parent=5 // pred_check_branch
        %604 = sbr.rel (%p601) target = $region88
      $region87: #{tpu_custom_call.1} parent=5 // pred_region
        %s605 = ssub.s32 %s30, 1
        // Predicated region
        $region89: #{tpu_custom_call.1} parent=87 // pred_check
          %p606 = pneg %p177
        $region90: #{tpu_custom_call.1} parent=87 // pred_check_branch
          %608 = sbr.rel (%p606) target = $region92
        $region91: #{tpu_custom_call.1} parent=87 // pred_region
          %609 = dma.done [#allocation7], 16
        $region92: #{tpu_custom_call.1} parent=87 // pred_fallthru
          _
        // Predicated region
        $region93: #{tpu_custom_call.1} parent=87 // pred_check
          %p610 = pneg %p219
        $region94: #{tpu_custom_call.1} parent=87 // pred_check_branch
          %612 = sbr.rel (%p610) target = $region96
        $region95: #{tpu_custom_call.1} parent=87 // pred_region
          %613 = dma.done [#allocation10], 16
        $region96: #{tpu_custom_call.1} parent=87 // pred_fallthru
          _
        // Predicated region
        $region97: #{tpu_custom_call.1} parent=87 // pred_check
          %p614 = pneg %p261
        $region98: #{tpu_custom_call.1} parent=87 // pred_check_branch
          %616 = sbr.rel (%p614) target = $region100
        $region99: #{tpu_custom_call.1} parent=87 // pred_region
          %617 = dma.done [#allocation10], 16
        $region100: #{tpu_custom_call.1} parent=87 // pred_fallthru
          _
        // Predicated region
        $region101: #{tpu_custom_call.1} parent=87 // pred_check
          %p618 = pneg %p303
        $region102: #{tpu_custom_call.1} parent=87 // pred_check_branch
          %620 = sbr.rel (%p618) target = $region104
        $region103: #{tpu_custom_call.1} parent=87 // pred_region
          %621 = dma.done [#allocation13], 16
        $region104: #{tpu_custom_call.1} parent=87 // pred_fallthru
          _
        // Predicated region
        $region105: #{tpu_custom_call.1} parent=87 // pred_check
          %p622 = pneg %p324
        $region106: #{tpu_custom_call.1} parent=87 // pred_check_branch
          %624 = sbr.rel (%p622) target = $region108
        $region107: #{tpu_custom_call.1} parent=87 // pred_region
          %625 = dma.done [#allocation13], 16
        $region108: #{tpu_custom_call.1} parent=87 // pred_fallthru
          _
        // Predicated region
        $region109: #{tpu_custom_call.1} parent=87 // pred_check
          %p626 = pneg %p345
        $region110: #{tpu_custom_call.1} parent=87 // pred_check_branch
          %628 = sbr.rel (%p626) target = $region112
        $region111: #{tpu_custom_call.1} parent=87 // pred_region
          %629 = dma.done [#allocation16], 16
        $region112: #{tpu_custom_call.1} parent=87 // pred_fallthru
          _
        %p630 = scmp.lt.s32.totalorder %s40, 1
        %s631 = scalar_select %p630, %s40, 1
        %p632 = scmp.lt.s32.totalorder %s41, 0
        %s633 = scalar_select %p632, %s41, 0
        %s634 = sadd.s32 %s633, %s631
        %s635 = smul.addr %s634, 8
        %s636 = scalar_lea.vmem %s0, %s635
        %p637 = pneg %p77
        %p638 = pneg %p74
        %p639 = scmp.lt.s32.totalorder %s40, 1
        %s640 = scalar_select %p639, %s40, 1
        %p641 = scmp.lt.s32.totalorder %s42, 0
        %s642 = scalar_select %p641, %s42, 0
        %s643 = sadd.s32 %s642, %s640
        %s644 = smul.addr %s643, 8
        %s645 = scalar_lea.vmem %s1, %s644
        %p646 = pneg %p105
        %p647 = pneg %p102
        %p648 = scmp.lt.s32.totalorder %s40, 1
        %s649 = scalar_select %p648, %s40, 1
        %p650 = scmp.lt.s32.totalorder %s41, 0
        %s651 = scalar_select %p650, %s41, 0
        %p652 = scmp.lt.s32.totalorder %s42, 0
        %s653 = scalar_select %p652, %s42, 0
        %s654 = sadd.s32 %s653, %s651
        %s655 = sadd.s32 %s654, %s649
        %s656 = smul.addr %s655, 8
        %s657 = scalar_lea.vmem %s2, %s656
        %p658 = pneg %p135
        %p659 = pneg %p132
        %p660 = pneg %p156
        %p661 = pneg %p153
        %p662 = pneg %p177
        %p663 = pneg %p174
        %p664 = pneg %p198
        %p665 = pneg %p195
        %p666 = pneg %p219
        %p667 = pneg %p216
        %p668 = pneg %p240
        %p669 = pneg %p237
        %p670 = pneg %p261
        %p671 = pneg %p258
        %p672 = pneg %p282
        %p673 = pneg %p279
        %p674 = pneg %p303
        %p675 = pneg %p300
        %p676 = pneg %p324
        %p677 = pneg %p321
        %p678 = pneg %p345
        %p679 = pneg %p342
        %p680 = pneg %p366
        %p681 = pneg %p363
        %p682 = pneg %p387
        %p683 = pneg %p384
        %p684 = pneg %p408
        %p685 = pneg %p405
        %p686 = pneg %p429
        %p687 = pneg %p426
        %p688 = pneg %p457
        %p689 = pneg %p454
        %s690 = sand.u32 %s444, 1
        %s691 = scalar_lea.sflag [#allocation8], %s690
        %s692 = sand.u32 %s444, 1
        %s693 = smul.addr %s692, 8
        %s694 = scalar_lea.vmem [#allocation17], %s693
        %p695 = scmp.lt.s32.totalorder %s40, 1
        %s696 = scalar_select %p695, %s40, 1
        %p697 = scmp.lt.s32.totalorder %s41, 0
        %s698 = scalar_select %p697, %s41, 0
        %s699 = sadd.s32 %s698, %s696
        %s700 = smul.addr %s699, 8
        %s701 = scalar_lea.vmem %s0, %s700
        %p702 = scmp.lt.s32.totalorder %s40, 1
        %s703 = scalar_select %p702, %s40, 1
        %p704 = scmp.lt.s32.totalorder %s42, 0
        %s705 = scalar_select %p704, %s42, 0
        %s706 = sadd.s32 %s705, %s703
        %s707 = smul.addr %s706, 8
        %s708 = scalar_lea.vmem %s1, %s707
        %p709 = scmp.lt.s32.totalorder %s40, 1
        %s710 = scalar_select %p709, %s40, 1
        %p711 = scmp.lt.s32.totalorder %s41, 0
        %s712 = scalar_select %p711, %s41, 0
        %p713 = scmp.lt.s32.totalorder %s42, 0
        %s714 = scalar_select %p713, %s42, 0
        %s715 = sadd.s32 %s714, %s712
        %s716 = sadd.s32 %s715, %s710
        %s717 = smul.addr %s716, 8
        %s718 = scalar_lea.vmem %s2, %s717
        %p720 = scmp.eq.s32.totalorder %s42, 0
        // Predicated region
        $region113: #{tpu_custom_call.1} parent=87 // pred_check
          %p721 = pneg %p720
        $region114: #{tpu_custom_call.1} parent=87 // pred_check_branch
          %723 = sbr.rel (%p721) target = $region116
        $region115: #{tpu_custom_call.1} parent=87 // pred_region
          %v724 = vld [vmem:[%s701] sm:$0xff]
          %v725 = vld [vmem:[%s3] sm:$0x1]
          %v726 = vld [vmem:[#allocation6] sm:$0x1]
          %vm727 = vcmask 261120
          %v728 = vsel %vm727, %v724, 0.0
          %729 = vadd.xlane.f32.xlu0 %v728
          %v730 = vpop.xlane.xlu0 %729
          %v731 = vrcp.pop 32.0
          %v732 = vmul.f32 %v730, %v731
          %v733 = vsub.f32 %v724, %v732
          %v734 = vmul.f32 %v733, %v733
          %v735 = vsel %vm727, %v734, 0.0
          %736 = vadd.xlane.f32.xlu0 %v735
          %v737 = vpop.xlane.xlu0 %736
          %v738 = vmul.f32 %v737, %v731
          %v739 = vadd.f32 %v738, 1e-05
          %v740 = vrsqrt.pop %v739
          %v741 = vmul.f32 %v733, %v740
          %v743 = vlaneseq
          %v744 = vshrl.u32 %v743, 7
          %v745 = vsub.s32 0, %v744
          %v746 = vrot.slane %v725, %v745
          %v748 = vmul.f32 %v741, %v746
          %v750 = vlaneseq
          %v751 = vshrl.u32 %v750, 7
          %v752 = vsub.s32 0, %v751
          %v753 = vrot.slane %v726, %v752
          %v755 = vadd.f32 %v748, %v753
          %v756 = vpack.c.bf16 %v755, %v755
          %v757 = vld [vmem:[%s5] sm:$0xf]
          %v758 = vld [vmem:[%s5 + $0x4] sm:$0xf]
          %v759 = vld [vmem:[%s5 + $0x8] sm:$0xf]
          %v760 = vld [vmem:[%s5 + $0xc] sm:$0xf]
          %v761 = vld [vmem:[#allocation9] sm:$0x1]
          %v763 = vlaneseq
          %v764 = vshrl.u32 %v763, 7
          %v765 = vsub.s32 0, %v764
          %v766 = vrot.slane %v761, %v765
          %v772 = vunpack.c.l.b16 %v757
          %v773 = vunpack.c.l.b16 %v758
          %v774 = vunpack.c.l.b16 %v759
          %v775 = vunpack.c.l.b16 %v760
          %v776 = vpack.c.b16 %v773, %v772
          %v777 = vpack.c.b16 %v775, %v774
          %v781 = vsel %vm727, %v756, 0
          %783 = vmatprep.subr.bf16.mxu0 0
          %784 = vmatpush1.bf16.msra.mxu0 %v776
          %785 = vmatprep.subr.bf16.mxu0 0
          %786 = vmatpush1.bf16.msra.mxu0 %v777
          %787 = vmatprep.subr.bf16.mxu0 0
          %788 = vmatpush1.bf16.msra.mxu0 0
          %789 = vmatprep.subr.bf16.mxu0 0
          %790 = vmatpush1.bf16.msra.mxu0 0
          %791 = vmatprep.subr.bf16.mxu0 0
          %792 = vmatpush1.bf16.msra.mxu0 0
          %793 = vmatprep.subr.bf16.mxu0 0
          %794 = vmatpush1.bf16.msra.mxu0 0
          %795 = vmatprep.subr.bf16.mxu0 0
          %796 = vmatpush1.bf16.msra.mxu0 0
          %797 = vmatprep.subr.bf16.mxu0 0
          %798 = vmatpush1.bf16.msra.mxu0 0
          %799 = vmatprep.subr.bf16.mxu0 0
          %800 = vmatpush1.bf16.msra.mxu0 0
          %801 = vmatprep.subr.bf16.mxu0 0
          %802 = vmatpush1.bf16.msra.mxu0 0
          %803 = vmatprep.subr.bf16.mxu0 0
          %804 = vmatpush1.bf16.msra.mxu0 0
          %805 = vmatprep.subr.bf16.mxu0 0
          %806 = vmatpush1.bf16.msra.mxu0 0
          %807 = vmatprep.subr.bf16.mxu0 0
          %808 = vmatpush1.bf16.msra.mxu0 0
          %809 = vmatprep.subr.bf16.mxu0 0
          %810 = vmatpush1.bf16.msra.mxu0 0
          %811 = vmatprep.subr.bf16.mxu0 0
          %812 = vmatpush1.bf16.msra.mxu0 0
          %813 = vmatprep.subr.bf16.mxu0 0
          %814 = vmatpush1.bf16.msra.mxu0 0
          %815 = vmatprep.mubr.bf16.mxu0 0
          %816 = vmatmul.mubr.bf16.gmra.mrb[0].mxu0 %v781
          %v817 = vpop.f32.mrb[0].mxu0
          %v818 = vadd.f32 %v766, %v817
          %v819 = vpop.f32.mrb[0].mxu0
          %v820 = vpop.f32.mrb[0].mxu0
          %v821 = vpop.f32.mrb[0].mxu0
          %822 = vdwg.mxu0
          %v823 = vmul.f32 %v818, 0.35355338
          %825 = vrot.lane.b32.xlu0 %v823, 120
          %v826 = vpop.permute.xlu0 %825
          %828 = vrot.lane.b32.xlu0 %v823, 112
          %v829 = vpop.permute.xlu0 %828
          %831 = vrot.lane.b32.xlu0 %v823, 104
          %v832 = vpop.permute.xlu0 %831
          %v834 = vpack.c.bf16 %v823, %v823
          %v835 = vpack.c.bf16 %v826, %v826
          %v836 = vpack.c.bf16 %v829, %v829
          %v837 = vpack.c.bf16 %v832, %v832
          %vm838 = vcmask 60416
          %839 = vst.msk [vmem:[#allocation2] sm:$0xf] %vm838, %v834
          %840 = vst.msk [vmem:[#allocation2 + $0x4] sm:$0xf] %vm838, %v835
          %841 = vst.msk [vmem:[#allocation2 + $0x8] sm:$0xf] %vm838, %v836
          %842 = vst.msk [vmem:[#allocation2 + $0xc] sm:$0xf] %vm838, %v837
          %vm843 = vcmask 7168
          %844 = vst.msk [vmem:[#allocation3] sm:$0xff] %vm843, -inf
          %845 = vst.msk [vmem:[#allocation3 + $0x8] sm:$0xff] %vm843, -inf
          %846 = vst.msk [vmem:[#allocation3 + $0x10] sm:$0xff] %vm843, -inf
          %847 = vst.msk [vmem:[#allocation3 + $0x18] sm:$0xff] %vm843, -inf
          %848 = vst.msk [vmem:[#allocation4] sm:$0xff] %vm843, 0.0
          %849 = vst.msk [vmem:[#allocation4 + $0x8] sm:$0xff] %vm843, 0.0
          %850 = vst.msk [vmem:[#allocation4 + $0x10] sm:$0xff] %vm843, 0.0
          %851 = vst.msk [vmem:[#allocation4 + $0x18] sm:$0xff] %vm843, 0.0
          %vm852 = vcmask 64512
          %853 = vst.msk [vmem:[#allocation5] sm:$0xff] %vm852, 0.0
          %854 = vst.msk [vmem:[#allocation5 + $0x8] sm:$0xff] %vm852, 0.0
          %855 = vst.msk [vmem:[#allocation5 + $0x10] sm:$0xff] %vm852, 0.0
          %856 = vst.msk [vmem:[#allocation5 + $0x18] sm:$0xff] %vm852, 0.0
        $region116: #{tpu_custom_call.1} parent=87 // pred_fallthru
          _
        %v857 = vld [vmem:[%s708] sm:$0xff]
        %v858 = vld [vmem:[%s3] sm:$0x1]
        %v859 = vld [vmem:[#allocation6] sm:$0x1]
        %vm860 = vcmask 261120
        %v861 = vsel %vm860, %v857, 0.0
        %862 = vadd.xlane.f32.xlu0 %v861
        %v863 = vpop.xlane.xlu0 %862
        %v864 = vrcp.pop 32.0
        %v865 = vmul.f32 %v863, %v864
        %v866 = vsub.f32 %v857, %v865
        %v867 = vmul.f32 %v866, %v866
        %v868 = vsel %vm860, %v867, 0.0
        %869 = vadd.xlane.f32.xlu0 %v868
        %v870 = vpop.xlane.xlu0 %869
        %v871 = vmul.f32 %v870, %v864
        %v872 = vadd.f32 %v871, 1e-05
        %v873 = vrsqrt.pop %v872
        %v874 = vmul.f32 %v866, %v873
        %v876 = vlaneseq
        %v877 = vshrl.u32 %v876, 7
        %v878 = vsub.s32 0, %v877
        %v879 = vrot.slane %v858, %v878
        %v881 = vmul.f32 %v874, %v879
        %v883 = vlaneseq
        %v884 = vshrl.u32 %v883, 7
        %v885 = vsub.s32 0, %v884
        %v886 = vrot.slane %v859, %v885
        %v888 = vadd.f32 %v881, %v886
        %v889 = vpack.c.bf16 %v888, %v888
        %v890 = vld [vmem:[%s7] sm:$0xf]
        %v891 = vld [vmem:[%s7 + $0x4] sm:$0xf]
        %v892 = vld [vmem:[%s7 + $0x8] sm:$0xf]
        %v893 = vld [vmem:[%s7 + $0xc] sm:$0xf]
        %v894 = vld [vmem:[#allocation11] sm:$0x1]
        %v896 = vlaneseq
        %v897 = vshrl.u32 %v896, 7
        %v898 = vsub.s32 0, %v897
        %v899 = vrot.slane %v894, %v898
        %v905 = vunpack.c.l.b16 %v890
        %v906 = vunpack.c.l.b16 %v891
        %v907 = vunpack.c.l.b16 %v892
        %v908 = vunpack.c.l.b16 %v893
        %v909 = vpack.c.b16 %v906, %v905
        %v910 = vpack.c.b16 %v908, %v907
        %v914 = vsel %vm860, %v889, 0
        %916 = vmatprep.subr.bf16.mxu0 0
        %917 = vmatpush1.bf16.msra.mxu0 %v909
        %918 = vmatprep.subr.bf16.mxu0 0
        %919 = vmatpush1.bf16.msra.mxu0 %v910
        %920 = vmatprep.subr.bf16.mxu0 0
        %921 = vmatpush1.bf16.msra.mxu0 0
        %922 = vmatprep.subr.bf16.mxu0 0
        %923 = vmatpush1.bf16.msra.mxu0 0
        %924 = vmatprep.subr.bf16.mxu0 0
        %925 = vmatpush1.bf16.msra.mxu0 0
        %926 = vmatprep.subr.bf16.mxu0 0
        %927 = vmatpush1.bf16.msra.mxu0 0
        %928 = vmatprep.subr.bf16.mxu0 0
        %929 = vmatpush1.bf16.msra.mxu0 0
        %930 = vmatprep.subr.bf16.mxu0 0
        %931 = vmatpush1.bf16.msra.mxu0 0
        %932 = vmatprep.subr.bf16.mxu0 0
        %933 = vmatpush1.bf16.msra.mxu0 0
        %934 = vmatprep.subr.bf16.mxu0 0
        %935 = vmatpush1.bf16.msra.mxu0 0
        %936 = vmatprep.subr.bf16.mxu0 0
        %937 = vmatpush1.bf16.msra.mxu0 0
        %938 = vmatprep.subr.bf16.mxu0 0
        %939 = vmatpush1.bf16.msra.mxu0 0
        %940 = vmatprep.subr.bf16.mxu0 0
        %941 = vmatpush1.bf16.msra.mxu0 0
        %942 = vmatprep.subr.bf16.mxu0 0
        %943 = vmatpush1.bf16.msra.mxu0 0
        %944 = vmatprep.subr.bf16.mxu0 0
        %945 = vmatpush1.bf16.msra.mxu0 0
        %946 = vmatprep.subr.bf16.mxu0 0
        %947 = vmatpush1.bf16.msra.mxu0 0
        %948 = vmatprep.mubr.bf16.mxu0 0
        %949 = vmatmul.mubr.bf16.gmra.mrb[0].mxu0 %v914
        %v950 = vpop.f32.mrb[0].mxu0
        %v951 = vadd.f32 %v899, %v950
        %v952 = vpop.f32.mrb[0].mxu0
        %v953 = vpop.f32.mrb[0].mxu0
        %v954 = vpop.f32.mrb[0].mxu0
        %955 = vdwg.mxu0
        %957 = vrot.lane.b32.xlu0 %v951, 120
        %v958 = vpop.permute.xlu0 %957
        %960 = vrot.lane.b32.xlu0 %v951, 112
        %v961 = vpop.permute.xlu0 %960
        %963 = vrot.lane.b32.xlu0 %v951, 104
        %v964 = vpop.permute.xlu0 %963
        %v966 = vpack.c.bf16 %v951, %v951
        %v967 = vpack.c.bf16 %v958, %v958
        %v968 = vpack.c.bf16 %v961, %v961
        %v969 = vpack.c.bf16 %v964, %v964
        %v970 = vld [vmem:[#allocation2] sm:$0xf]
        %v971 = vld [vmem:[#allocation2 + $0x4] sm:$0xf]
        %v972 = vld [vmem:[#allocation2 + $0x8] sm:$0xf]
        %v973 = vld [vmem:[#allocation2 + $0xc] sm:$0xf]
        %v974 = vld [vmem:[%s718] sm:$0xff]
        %vm975 = vcmask 64512
        %v977 = vsel %vm975, %v970, 0
        %v980 = vsel %vm975, %v966, 0
        %982 = vmatprep.subr.bf16.mxu0 0
        %983 = vmatpush1.bf16.xpose.msra.mxu0 %v980
        %984 = vmatprep.subr.bf16.mxu0 0
        %985 = vmatpush1.bf16.xpose.msra.mxu0 0
        %986 = vmatprep.subr.bf16.mxu0 0
        %987 = vmatpush1.bf16.xpose.msra.mxu0 0
        %988 = vmatprep.subr.bf16.mxu0 0
        %989 = vmatpush1.bf16.xpose.msra.mxu0 0
        %990 = vmatprep.subr.bf16.mxu0 0
        %991 = vmatpush1.bf16.xpose.msra.mxu0 0
        %992 = vmatprep.subr.bf16.mxu0 0
        %993 = vmatpush1.bf16.xpose.msra.mxu0 0
        %994 = vmatprep.subr.bf16.mxu0 0
        %995 = vmatpush1.bf16.xpose.msra.mxu0 0
        %996 = vmatprep.subr.bf16.mxu0 0
        %997 = vmatpush1.bf16.xpose.msra.mxu0 0
        %998 = vmatprep.subr.bf16.mxu0 0
        %999 = vmatpush1.bf16.xpose.msra.mxu0 0
        %1000 = vmatprep.subr.bf16.mxu0 0
        %1001 = vmatpush1.bf16.xpose.msra.mxu0 0
        %1002 = vmatprep.subr.bf16.mxu0 0
        %1003 = vmatpush1.bf16.xpose.msra.mxu0 0
        %1004 = vmatprep.subr.bf16.mxu0 0
        %1005 = vmatpush1.bf16.xpose.msra.mxu0 0
        %1006 = vmatprep.subr.bf16.mxu0 0
        %1007 = vmatpush1.bf16.xpose.msra.mxu0 0
        %1008 = vmatprep.subr.bf16.mxu0 0
        %1009 = vmatpush1.bf16.xpose.msra.mxu0 0
        %1010 = vmatprep.subr.bf16.mxu0 0
        %1011 = vmatpush1.bf16.xpose.msra.mxu0 0
        %1012 = vmatprep.subr.bf16.mxu0 0
        %1013 = vmatpush1.bf16.xpose.msra.mxu0 0
        %1014 = vmatprep.mubr.bf16.mxu0 0
        %1015 = vmatmul.mubr.bf16.gmra.mrb[0].mxu0 %v977
        %v1016 = vpop.f32.mrb[0].mxu0
        %v1017 = vadd.f32 %v974, %v1016
        %v1018 = vpop.f32.mrb[0].mxu0
        %v1019 = vpop.f32.mrb[0].mxu0
        %v1020 = vpop.f32.mrb[0].mxu0
        %1021 = vdwg.mxu0
        %v1023 = vsel %vm975, %v971, 0
        %v1026 = vsel %vm975, %v967, 0
        %1028 = vmatprep.subr.bf16.mxu0 0
        %1029 = vmatpush1.bf16.xpose.msra.mxu0 %v1026
        %1030 = vmatprep.subr.bf16.mxu0 0
        %1031 = vmatpush1.bf16.xpose.msra.mxu0 0
        %1032 = vmatprep.subr.bf16.mxu0 0
        %1033 = vmatpush1.bf16.xpose.msra.mxu0 0
        %1034 = vmatprep.subr.bf16.mxu0 0
        %1035 = vmatpush1.bf16.xpose.msra.mxu0 0
        %1036 = vmatprep.subr.bf16.mxu0 0
        %1037 = vmatpush1.bf16.xpose.msra.mxu0 0
        %1038 = vmatprep.subr.bf16.mxu0 0
        %1039 = vmatpush1.bf16.xpose.msra.mxu0 0
        %1040 = vmatprep.subr.bf16.mxu0 0
        %1041 = vmatpush1.bf16.xpose.msra.mxu0 0
        %1042 = vmatprep.subr.bf16.mxu0 0
        %1043 = vmatpush1.bf16.xpose.msra.mxu0 0
        %1044 = vmatprep.subr.bf16.mxu0 0
        %1045 = vmatpush1.bf16.xpose.msra.mxu0 0
        %1046 = vmatprep.subr.bf16.mxu0 0
        %1047 = vmatpush1.bf16.xpose.msra.mxu0 0
        %1048 = vmatprep.subr.bf16.mxu0 0
        %1049 = vmatpush1.bf16.xpose.msra.mxu0 0
        %1050 = vmatprep.subr.bf16.mxu0 0
        %1051 = vmatpush1.bf16.xpose.msra.mxu0 0
        %1052 = vmatprep.subr.bf16.mxu0 0
        %1053 = vmatpush1.bf16.xpose.msra.mxu0 0
        %1054 = vmatprep.subr.bf16.mxu0 0
        %1055 = vmatpush1.bf16.xpose.msra.mxu0 0
        %1056 = vmatprep.subr.bf16.mxu0 0
        %1057 = vmatpush1.bf16.xpose.msra.mxu0 0
        %1058 = vmatprep.subr.bf16.mxu0 0
        %1059 = vmatpush1.bf16.xpose.msra.mxu0 0
        %1060 = vmatprep.mubr.bf16.mxu0 0
        %1061 = vmatmul.mubr.bf16.gmra.mrb[0].mxu0 %v1023
        %v1062 = vpop.f32.mrb[0].mxu0
        %v1063 = vadd.f32 %v974, %v1062
        %v1064 = vpop.f32.mrb[0].mxu0
        %v1065 = vpop.f32.mrb[0].mxu0
        %v1066 = vpop.f32.mrb[0].mxu0
        %1067 = vdwg.mxu0
        %v1069 = vsel %vm975, %v972, 0
        %v1072 = vsel %vm975, %v968, 0
        %1074 = vmatprep.subr.bf16.mxu0 0
        %1075 = vmatpush1.bf16.xpose.msra.mxu0 %v1072
        %1076 = vmatprep.subr.bf16.mxu0 0
        %1077 = vmatpush1.bf16.xpose.msra.mxu0 0
        %1078 = vmatprep.subr.bf16.mxu0 0
        %1079 = vmatpush1.bf16.xpose.msra.mxu0 0
        %1080 = vmatprep.subr.bf16.mxu0 0
        %1081 = vmatpush1.bf16.xpose.msra.mxu0 0
        %1082 = vmatprep.subr.bf16.mxu0 0
        %1083 = vmatpush1.bf16.xpose.msra.mxu0 0
        %1084 = vmatprep.subr.bf16.mxu0 0
        %1085 = vmatpush1.bf16.xpose.msra.mxu0 0
        %1086 = vmatprep.subr.bf16.mxu0 0
        %1087 = vmatpush1.bf16.xpose.msra.mxu0 0
        %1088 = vmatprep.subr.bf16.mxu0 0
        %1089 = vmatpush1.bf16.xpose.msra.mxu0 0
        %1090 = vmatprep.subr.bf16.mxu0 0
        %1091 = vmatpush1.bf16.xpose.msra.mxu0 0
        %1092 = vmatprep.subr.bf16.mxu0 0
        %1093 = vmatpush1.bf16.xpose.msra.mxu0 0
        %1094 = vmatprep.subr.bf16.mxu0 0
        %1095 = vmatpush1.bf16.xpose.msra.mxu0 0
        %1096 = vmatprep.subr.bf16.mxu0 0
        %1097 = vmatpush1.bf16.xpose.msra.mxu0 0
        %1098 = vmatprep.subr.bf16.mxu0 0
        %1099 = vmatpush1.bf16.xpose.msra.mxu0 0
        %1100 = vmatprep.subr.bf16.mxu0 0
        %1101 = vmatpush1.bf16.xpose.msra.mxu0 0
        %1102 = vmatprep.subr.bf16.mxu0 0
        %1103 = vmatpush1.bf16.xpose.msra.mxu0 0
        %1104 = vmatprep.subr.bf16.mxu0 0
        %1105 = vmatpush1.bf16.xpose.msra.mxu0 0
        %1106 = vmatprep.mubr.bf16.mxu0 0
        %1107 = vmatmul.mubr.bf16.gmra.mrb[0].mxu0 %v1069
        %v1108 = vpop.f32.mrb[0].mxu0
        %v1109 = vadd.f32 %v974, %v1108
        %v1110 = vpop.f32.mrb[0].mxu0
        %v1111 = vpop.f32.mrb[0].mxu0
        %v1112 = vpop.f32.mrb[0].mxu0
        %1113 = vdwg.mxu0
        %v1115 = vsel %vm975, %v973, 0
        %v1118 = vsel %vm975, %v969, 0
        %1120 = vmatprep.subr.bf16.mxu0 0
        %1121 = vmatpush1.bf16.xpose.msra.mxu0 %v1118
        %1122 = vmatprep.subr.bf16.mxu0 0
        %1123 = vmatpush1.bf16.xpose.msra.mxu0 0
        %1124 = vmatprep.subr.bf16.mxu0 0
        %1125 = vmatpush1.bf16.xpose.msra.mxu0 0
        %1126 = vmatprep.subr.bf16.mxu0 0
        %1127 = vmatpush1.bf16.xpose.msra.mxu0 0
        %1128 = vmatprep.subr.bf16.mxu0 0
        %1129 = vmatpush1.bf16.xpose.msra.mxu0 0
        %1130 = vmatprep.subr.bf16.mxu0 0
        %1131 = vmatpush1.bf16.xpose.msra.mxu0 0
        %1132 = vmatprep.subr.bf16.mxu0 0
        %1133 = vmatpush1.bf16.xpose.msra.mxu0 0
        %1134 = vmatprep.subr.bf16.mxu0 0
        %1135 = vmatpush1.bf16.xpose.msra.mxu0 0
        %1136 = vmatprep.subr.bf16.mxu0 0
        %1137 = vmatpush1.bf16.xpose.msra.mxu0 0
        %1138 = vmatprep.subr.bf16.mxu0 0
        %1139 = vmatpush1.bf16.xpose.msra.mxu0 0
        %1140 = vmatprep.subr.bf16.mxu0 0
        %1141 = vmatpush1.bf16.xpose.msra.mxu0 0
        %1142 = vmatprep.subr.bf16.mxu0 0
        %1143 = vmatpush1.bf16.xpose.msra.mxu0 0
        %1144 = vmatprep.subr.bf16.mxu0 0
        %1145 = vmatpush1.bf16.xpose.msra.mxu0 0
        %1146 = vmatprep.subr.bf16.mxu0 0
        %1147 = vmatpush1.bf16.xpose.msra.mxu0 0
        %1148 = vmatprep.subr.bf16.mxu0 0
        %1149 = vmatpush1.bf16.xpose.msra.mxu0 0
        %1150 = vmatprep.subr.bf16.mxu0 0
        %1151 = vmatpush1.bf16.xpose.msra.mxu0 0
        %1152 = vmatprep.mubr.bf16.mxu0 0
        %1153 = vmatmul.mubr.bf16.gmra.mrb[0].mxu0 %v1115
        %v1154 = vpop.f32.mrb[0].mxu0
        %v1155 = vadd.f32 %v974, %v1154
        %v1156 = vpop.f32.mrb[0].mxu0
        %v1157 = vpop.f32.mrb[0].mxu0
        %v1158 = vpop.f32.mrb[0].mxu0
        %1159 = vdwg.mxu0
        %v1160 = vld [vmem:[#allocation3] sm:$0xff]
        %v1161 = vld [vmem:[#allocation3 + $0x8] sm:$0xff]
        %v1162 = vld [vmem:[#allocation3 + $0x10] sm:$0xff]
        %v1163 = vld [vmem:[#allocation3 + $0x18] sm:$0xff]
        %v1164 = vsel %vm975, %v1017, -inf
        %1165 = vmax.xlane.f32.xlu0 %v1164
        %v1166 = vpop.xlane.xlu0 %1165
        %v1167 = vsel %vm975, %v1063, -inf
        %1168 = vmax.xlane.f32.xlu0 %v1167
        %v1169 = vpop.xlane.xlu0 %1168
        %v1170 = vsel %vm975, %v1109, -inf
        %1171 = vmax.xlane.f32.xlu0 %v1170
        %v1172 = vpop.xlane.xlu0 %1171
        %v1173 = vsel %vm975, %v1155, -inf
        %1174 = vmax.xlane.f32.xlu0 %v1173
        %v1175 = vpop.xlane.xlu0 %1174
        %v1176 = vmax.f32 %v1160, %v1166
        %v1177 = vmax.f32 %v1161, %v1169
        %v1178 = vmax.f32 %v1162, %v1172
        %v1179 = vmax.f32 %v1163, %v1175
        %v1180 = vsub.f32 %v1160, %v1176
        %v1181 = vsub.f32 %v1161, %v1177
        %v1182 = vsub.f32 %v1162, %v1178
        %v1183 = vsub.f32 %v1163, %v1179
        %v1184 = vmul.f32 %v1180, 1.442695
        %v1185 = vpow.pop %v1184
        %v1186 = vmul.f32 %v1181, 1.442695
        %v1187 = vpow.pop %v1186
        %v1188 = vmul.f32 %v1182, 1.442695
        %v1189 = vpow.pop %v1188
        %v1190 = vmul.f32 %v1183, 1.442695
        %v1191 = vpow.pop %v1190
        %1193 = vset.pattern.permute.xlu0 0
        %1194 = vperm.xlu0 %1193, %v1176
        %v1195 = vpop.permute.xlu0 %1194
        %1198 = vset.pattern.permute.xlu0 0
        %1199 = vperm.xlu0 %1198, %v1177
        %v1200 = vpop.permute.xlu0 %1199
        %1203 = vset.pattern.permute.xlu0 0
        %1204 = vperm.xlu0 %1203, %v1178
        %v1205 = vpop.permute.xlu0 %1204
        %1208 = vset.pattern.permute.xlu0 0
        %1209 = vperm.xlu0 %1208, %v1179
        %v1210 = vpop.permute.xlu0 %1209
        %v1212 = vsub.f32 %v1017, %v1195
        %v1213 = vsub.f32 %v1063, %v1200
        %v1214 = vsub.f32 %v1109, %v1205
        %v1215 = vsub.f32 %v1155, %v1210
        %v1216 = vmul.f32 %v1212, 1.442695
        %v1217 = vpow.pop %v1216
        %v1218 = vmul.f32 %v1213, 1.442695
        %v1219 = vpow.pop %v1218
        %v1220 = vmul.f32 %v1214, 1.442695
        %v1221 = vpow.pop %v1220
        %v1222 = vmul.f32 %v1215, 1.442695
        %v1223 = vpow.pop %v1222
        %v1224 = vld [vmem:[#allocation4] sm:$0xff]
        %v1225 = vld [vmem:[#allocation4 + $0x8] sm:$0xff]
        %v1226 = vld [vmem:[#allocation4 + $0x10] sm:$0xff]
        %v1227 = vld [vmem:[#allocation4 + $0x18] sm:$0xff]
        %v1228 = vmul.f32 %v1185, %v1224
        %v1229 = vmul.f32 %v1187, %v1225
        %v1230 = vmul.f32 %v1189, %v1226
        %v1231 = vmul.f32 %v1191, %v1227
        %v1232 = vsel %vm975, %v1217, 0.0
        %1233 = vadd.xlane.f32.xlu0 %v1232
        %v1234 = vpop.xlane.xlu0 %1233
        %v1235 = vsel %vm975, %v1219, 0.0
        %1236 = vadd.xlane.f32.xlu0 %v1235
        %v1237 = vpop.xlane.xlu0 %1236
        %v1238 = vsel %vm975, %v1221, 0.0
        %1239 = vadd.xlane.f32.xlu0 %v1238
        %v1240 = vpop.xlane.xlu0 %1239
        %v1241 = vsel %vm975, %v1223, 0.0
        %1242 = vadd.xlane.f32.xlu0 %v1241
        %v1243 = vpop.xlane.xlu0 %1242
        %v1244 = vadd.f32 %v1228, %v1234
        %v1245 = vadd.f32 %v1229, %v1237
        %v1246 = vadd.f32 %v1230, %v1240
        %v1247 = vadd.f32 %v1231, %v1243
        %vm1248 = vcmask 7168
        %1249 = vst.msk [vmem:[#allocation4] sm:$0xff] %vm1248, %v1244
        %1250 = vst.msk [vmem:[#allocation4 + $0x8] sm:$0xff] %vm1248, %v1245
        %1251 = vst.msk [vmem:[#allocation4 + $0x10] sm:$0xff] %vm1248, %v1246
        %1252 = vst.msk [vmem:[#allocation4 + $0x18] sm:$0xff] %vm1248, %v1247
        %v1253 = vld [vmem:[#allocation5] sm:$0xff]
        %v1254 = vld [vmem:[#allocation5 + $0x8] sm:$0xff]
        %v1255 = vld [vmem:[#allocation5 + $0x10] sm:$0xff]
        %v1256 = vld [vmem:[#allocation5 + $0x18] sm:$0xff]
        %1258 = vset.pattern.permute.xlu0 0
        %1259 = vperm.xlu0 %1258, %v1185
        %v1260 = vpop.permute.xlu0 %1259
        %1263 = vset.pattern.permute.xlu0 0
        %1264 = vperm.xlu0 %1263, %v1187
        %v1265 = vpop.permute.xlu0 %1264
        %1268 = vset.pattern.permute.xlu0 0
        %1269 = vperm.xlu0 %1268, %v1189
        %v1270 = vpop.permute.xlu0 %1269
        %1273 = vset.pattern.permute.xlu0 0
        %1274 = vperm.xlu0 %1273, %v1191
        %v1275 = vpop.permute.xlu0 %1274
        %v1277 = vmul.f32 %v1260, %v1253
        %v1278 = vmul.f32 %v1265, %v1254
        %v1279 = vmul.f32 %v1270, %v1255
        %v1280 = vmul.f32 %v1275, %v1256
        %v1281 = vpack.c.bf16 %v1217, %v1217
        %v1282 = vpack.c.bf16 %v1219, %v1219
        %v1283 = vpack.c.bf16 %v1221, %v1221
        %v1284 = vpack.c.bf16 %v1223, %v1223
        %1286 = vrot.lane.b32.xlu0 %v966, 96
        %v1287 = vpop.permute.xlu0 %1286
        %v1289 = vsel %vm975, %v1281, 0
        %vm1291 = vcmask 1043456
        %v1293 = vsel %vm1291, %v1287, 0
        %1295 = vmatprep.subr.bf16.mxu0 0
        %1296 = vmatpush1.bf16.msra.mxu0 %v1293
        %1297 = vmatprep.subr.bf16.mxu0 0
        %1298 = vmatpush1.bf16.msra.mxu0 0
        %1299 = vmatprep.subr.bf16.mxu0 0
        %1300 = vmatpush1.bf16.msra.mxu0 0
        %1301 = vmatprep.subr.bf16.mxu0 0
        %1302 = vmatpush1.bf16.msra.mxu0 0
        %1303 = vmatprep.subr.bf16.mxu0 0
        %1304 = vmatpush1.bf16.msra.mxu0 0
        %1305 = vmatprep.subr.bf16.mxu0 0
        %1306 = vmatpush1.bf16.msra.mxu0 0
        %1307 = vmatprep.subr.bf16.mxu0 0
        %1308 = vmatpush1.bf16.msra.mxu0 0
        %1309 = vmatprep.subr.bf16.mxu0 0
        %1310 = vmatpush1.bf16.msra.mxu0 0
        %1311 = vmatprep.subr.bf16.mxu0 0
        %1312 = vmatpush1.bf16.msra.mxu0 0
        %1313 = vmatprep.subr.bf16.mxu0 0
        %1314 = vmatpush1.bf16.msra.mxu0 0
        %1315 = vmatprep.subr.bf16.mxu0 0
        %1316 = vmatpush1.bf16.msra.mxu0 0
        %1317 = vmatprep.subr.bf16.mxu0 0
        %1318 = vmatpush1.bf16.msra.mxu0 0
        %1319 = vmatprep.subr.bf16.mxu0 0
        %1320 = vmatpush1.bf16.msra.mxu0 0
        %1321 = vmatprep.subr.bf16.mxu0 0
        %1322 = vmatpush1.bf16.msra.mxu0 0
        %1323 = vmatprep.subr.bf16.mxu0 0
        %1324 = vmatpush1.bf16.msra.mxu0 0
        %1325 = vmatprep.subr.bf16.mxu0 0
        %1326 = vmatpush1.bf16.msra.mxu0 0
        %1327 = vmatprep.mubr.bf16.mxu0 0
        %1328 = vmatmul.mubr.bf16.gmra.mrb[0].mxu0 %v1289
        %v1329 = vpop.f32.mrb[0].mxu0
        %v1330 = vadd.f32 0.0, %v1329
        %v1331 = vpop.f32.mrb[0].mxu0
        %v1332 = vpop.f32.mrb[0].mxu0
        %v1333 = vpop.f32.mrb[0].mxu0
        %1334 = vdwg.mxu0
        %1336 = vrot.lane.b32.xlu0 %v967, 96
        %v1337 = vpop.permute.xlu0 %1336
        %v1339 = vsel %vm975, %v1282, 0
        %v1342 = vsel %vm1291, %v1337, 0
        %1344 = vmatprep.subr.bf16.mxu0 0
        %1345 = vmatpush1.bf16.msra.mxu0 %v1342
        %1346 = vmatprep.subr.bf16.mxu0 0
        %1347 = vmatpush1.bf16.msra.mxu0 0
        %1348 = vmatprep.subr.bf16.mxu0 0
        %1349 = vmatpush1.bf16.msra.mxu0 0
        %1350 = vmatprep.subr.bf16.mxu0 0
        %1351 = vmatpush1.bf16.msra.mxu0 0
        %1352 = vmatprep.subr.bf16.mxu0 0
        %1353 = vmatpush1.bf16.msra.mxu0 0
        %1354 = vmatprep.subr.bf16.mxu0 0
        %1355 = vmatpush1.bf16.msra.mxu0 0
        %1356 = vmatprep.subr.bf16.mxu0 0
        %1357 = vmatpush1.bf16.msra.mxu0 0
        %1358 = vmatprep.subr.bf16.mxu0 0
        %1359 = vmatpush1.bf16.msra.mxu0 0
        %1360 = vmatprep.subr.bf16.mxu0 0
        %1361 = vmatpush1.bf16.msra.mxu0 0
        %1362 = vmatprep.subr.bf16.mxu0 0
        %1363 = vmatpush1.bf16.msra.mxu0 0
        %1364 = vmatprep.subr.bf16.mxu0 0
        %1365 = vmatpush1.bf16.msra.mxu0 0
        %1366 = vmatprep.subr.bf16.mxu0 0
        %1367 = vmatpush1.bf16.msra.mxu0 0
        %1368 = vmatprep.subr.bf16.mxu0 0
        %1369 = vmatpush1.bf16.msra.mxu0 0
        %1370 = vmatprep.subr.bf16.mxu0 0
        %1371 = vmatpush1.bf16.msra.mxu0 0
        %1372 = vmatprep.subr.bf16.mxu0 0
        %1373 = vmatpush1.bf16.msra.mxu0 0
        %1374 = vmatprep.subr.bf16.mxu0 0
        %1375 = vmatpush1.bf16.msra.mxu0 0
        %1376 = vmatprep.mubr.bf16.mxu0 0
        %1377 = vmatmul.mubr.bf16.gmra.mrb[0].mxu0 %v1339
        %v1378 = vpop.f32.mrb[0].mxu0
        %v1379 = vadd.f32 0.0, %v1378
        %v1380 = vpop.f32.mrb[0].mxu0
        %v1381 = vpop.f32.mrb[0].mxu0
        %v1382 = vpop.f32.mrb[0].mxu0
        %1383 = vdwg.mxu0
        %1385 = vrot.lane.b32.xlu0 %v968, 96
        %v1386 = vpop.permute.xlu0 %1385
        %v1388 = vsel %vm975, %v1283, 0
        %v1391 = vsel %vm1291, %v1386, 0
        %1393 = vmatprep.subr.bf16.mxu0 0
        %1394 = vmatpush1.bf16.msra.mxu0 %v1391
        %1395 = vmatprep.subr.bf16.mxu0 0
        %1396 = vmatpush1.bf16.msra.mxu0 0
        %1397 = vmatprep.subr.bf16.mxu0 0
        %1398 = vmatpush1.bf16.msra.mxu0 0
        %1399 = vmatprep.subr.bf16.mxu0 0
        %1400 = vmatpush1.bf16.msra.mxu0 0
        %1401 = vmatprep.subr.bf16.mxu0 0
        %1402 = vmatpush1.bf16.msra.mxu0 0
        %1403 = vmatprep.subr.bf16.mxu0 0
        %1404 = vmatpush1.bf16.msra.mxu0 0
        %1405 = vmatprep.subr.bf16.mxu0 0
        %1406 = vmatpush1.bf16.msra.mxu0 0
        %1407 = vmatprep.subr.bf16.mxu0 0
        %1408 = vmatpush1.bf16.msra.mxu0 0
        %1409 = vmatprep.subr.bf16.mxu0 0
        %1410 = vmatpush1.bf16.msra.mxu0 0
        %1411 = vmatprep.subr.bf16.mxu0 0
        %1412 = vmatpush1.bf16.msra.mxu0 0
        %1413 = vmatprep.subr.bf16.mxu0 0
        %1414 = vmatpush1.bf16.msra.mxu0 0
        %1415 = vmatprep.subr.bf16.mxu0 0
        %1416 = vmatpush1.bf16.msra.mxu0 0
        %1417 = vmatprep.subr.bf16.mxu0 0
        %1418 = vmatpush1.bf16.msra.mxu0 0
        %1419 = vmatprep.subr.bf16.mxu0 0
        %1420 = vmatpush1.bf16.msra.mxu0 0
        %1421 = vmatprep.subr.bf16.mxu0 0
        %1422 = vmatpush1.bf16.msra.mxu0 0
        %1423 = vmatprep.subr.bf16.mxu0 0
        %1424 = vmatpush1.bf16.msra.mxu0 0
        %1425 = vmatprep.mubr.bf16.mxu0 0
        %1426 = vmatmul.mubr.bf16.gmra.mrb[0].mxu0 %v1388
        %v1427 = vpop.f32.mrb[0].mxu0
        %v1428 = vadd.f32 0.0, %v1427
        %v1429 = vpop.f32.mrb[0].mxu0
        %v1430 = vpop.f32.mrb[0].mxu0
        %v1431 = vpop.f32.mrb[0].mxu0
        %1432 = vdwg.mxu0
        %1434 = vrot.lane.b32.xlu0 %v969, 96
        %v1435 = vpop.permute.xlu0 %1434
        %v1437 = vsel %vm975, %v1284, 0
        %v1440 = vsel %vm1291, %v1435, 0
        %1442 = vmatprep.subr.bf16.mxu0 0
        %1443 = vmatpush1.bf16.msra.mxu0 %v1440
        %1444 = vmatprep.subr.bf16.mxu0 0
        %1445 = vmatpush1.bf16.msra.mxu0 0
        %1446 = vmatprep.subr.bf16.mxu0 0
        %1447 = vmatpush1.bf16.msra.mxu0 0
        %1448 = vmatprep.subr.bf16.mxu0 0
        %1449 = vmatpush1.bf16.msra.mxu0 0
        %1450 = vmatprep.subr.bf16.mxu0 0
        %1451 = vmatpush1.bf16.msra.mxu0 0
        %1452 = vmatprep.subr.bf16.mxu0 0
        %1453 = vmatpush1.bf16.msra.mxu0 0
        %1454 = vmatprep.subr.bf16.mxu0 0
        %1455 = vmatpush1.bf16.msra.mxu0 0
        %1456 = vmatprep.subr.bf16.mxu0 0
        %1457 = vmatpush1.bf16.msra.mxu0 0
        %1458 = vmatprep.subr.bf16.mxu0 0
        %1459 = vmatpush1.bf16.msra.mxu0 0
        %1460 = vmatprep.subr.bf16.mxu0 0
        %1461 = vmatpush1.bf16.msra.mxu0 0
        %1462 = vmatprep.subr.bf16.mxu0 0
        %1463 = vmatpush1.bf16.msra.mxu0 0
        %1464 = vmatprep.subr.bf16.mxu0 0
        %1465 = vmatpush1.bf16.msra.mxu0 0
        %1466 = vmatprep.subr.bf16.mxu0 0
        %1467 = vmatpush1.bf16.msra.mxu0 0
        %1468 = vmatprep.subr.bf16.mxu0 0
        %1469 = vmatpush1.bf16.msra.mxu0 0
        %1470 = vmatprep.subr.bf16.mxu0 0
        %1471 = vmatpush1.bf16.msra.mxu0 0
        %1472 = vmatprep.subr.bf16.mxu0 0
        %1473 = vmatpush1.bf16.msra.mxu0 0
        %1474 = vmatprep.mubr.bf16.mxu0 0
        %1475 = vmatmul.mubr.bf16.gmra.mrb[0].mxu0 %v1437
        %v1476 = vpop.f32.mrb[0].mxu0
        %v1477 = vadd.f32 0.0, %v1476
        %v1478 = vpop.f32.mrb[0].mxu0
        %v1479 = vpop.f32.mrb[0].mxu0
        %v1480 = vpop.f32.mrb[0].mxu0
        %1481 = vdwg.mxu0
        %v1482 = vadd.f32 %v1277, %v1330
        %v1483 = vadd.f32 %v1278, %v1379
        %v1484 = vadd.f32 %v1279, %v1428
        %v1485 = vadd.f32 %v1280, %v1477
        %1486 = vst.msk [vmem:[#allocation5] sm:$0xff] %vm975, %v1482
        %1487 = vst.msk [vmem:[#allocation5 + $0x8] sm:$0xff] %vm975, %v1483
        %1488 = vst.msk [vmem:[#allocation5 + $0x10] sm:$0xff] %vm975, %v1484
        %1489 = vst.msk [vmem:[#allocation5 + $0x18] sm:$0xff] %vm975, %v1485
        %1490 = vst.msk [vmem:[#allocation3] sm:$0xff] %vm1248, %v1176
        %1491 = vst.msk [vmem:[#allocation3 + $0x8] sm:$0xff] %vm1248, %v1177
        %1492 = vst.msk [vmem:[#allocation3 + $0x10] sm:$0xff] %vm1248, %v1178
        %1493 = vst.msk [vmem:[#allocation3 + $0x18] sm:$0xff] %vm1248, %v1179
        // Predicated region
        $region117: #{tpu_custom_call.1} parent=87 // pred_check
          %p1494 = pneg %p720
        $region118: #{tpu_custom_call.1} parent=87 // pred_check_branch
          %1496 = sbr.rel (%p1494) target = $region120
        $region119: #{tpu_custom_call.1} parent=87 // pred_region
          %v1497 = vld [vmem:[#allocation5] sm:$0xff]
          %v1498 = vld [vmem:[#allocation5 + $0x8] sm:$0xff]
          %v1499 = vld [vmem:[#allocation5 + $0x10] sm:$0xff]
          %v1500 = vld [vmem:[#allocation5 + $0x18] sm:$0xff]
          %v1501 = vld [vmem:[#allocation4] sm:$0xff]
          %v1502 = vld [vmem:[#allocation4 + $0x8] sm:$0xff]
          %v1503 = vld [vmem:[#allocation4 + $0x10] sm:$0xff]
          %v1504 = vld [vmem:[#allocation4 + $0x18] sm:$0xff]
          %1506 = vset.pattern.permute.xlu0 0
          %1507 = vperm.xlu0 %1506, %v1501
          %v1508 = vpop.permute.xlu0 %1507
          %1511 = vset.pattern.permute.xlu0 0
          %1512 = vperm.xlu0 %1511, %v1502
          %v1513 = vpop.permute.xlu0 %1512
          %1516 = vset.pattern.permute.xlu0 0
          %1517 = vperm.xlu0 %1516, %v1503
          %v1518 = vpop.permute.xlu0 %1517
          %1521 = vset.pattern.permute.xlu0 0
          %1522 = vperm.xlu0 %1521, %v1504
          %v1523 = vpop.permute.xlu0 %1522
          %v1525 = vrcp.pop %v1508
          %v1526 = vmul.f32 %v1497, %v1525
          %v1527 = vrcp.pop %v1513
          %v1528 = vmul.f32 %v1498, %v1527
          %v1529 = vrcp.pop %v1518
          %v1530 = vmul.f32 %v1499, %v1529
          %v1531 = vrcp.pop %v1523
          %v1532 = vmul.f32 %v1500, %v1531
          %1534 = vrot.lane.b32.xlu0 %v1528, 8
          %v1535 = vpop.permute.xlu0 %1534
          %1538 = vrot.lane.b32.xlu0 %v1530, 16
          %v1539 = vpop.permute.xlu0 %1538
          %1542 = vrot.lane.b32.xlu0 %v1532, 24
          %v1543 = vpop.permute.xlu0 %1542
          %v1545 = vsel %vm975, %v1526, %v1535
          %vm1546 = vcmask 130048
          %v1547 = vsel %vm1546, %v1545, %v1539
          %vm1548 = vcmask 195584
          %v1549 = vsel %vm1548, %v1547, %v1543
          %v1550 = vpack.c.bf16 %v1549, %v1549
          %v1551 = vld [vmem:[%s9] sm:$0xf]
          %v1552 = vld [vmem:[%s9 + $0x4] sm:$0xf]
          %v1553 = vld [vmem:[%s9 + $0x8] sm:$0xf]
          %v1554 = vld [vmem:[%s9 + $0xc] sm:$0xf]
          %v1555 = vld [vmem:[#allocation12] sm:$0x1]
          %v1557 = vlaneseq
          %v1558 = vshrl.u32 %v1557, 7
          %v1559 = vsub.s32 0, %v1558
          %v1560 = vrot.slane %v1555, %v1559
          %v1566 = vunpack.c.l.b16 %v1551
          %v1567 = vunpack.c.l.b16 %v1552
          %v1568 = vunpack.c.l.b16 %v1553
          %v1569 = vunpack.c.l.b16 %v1554
          %v1570 = vpack.c.b16 %v1567, %v1566
          %v1571 = vpack.c.b16 %v1569, %v1568
          %v1575 = vsel %vm860, %v1550, 0
          %1577 = vmatprep.subr.bf16.mxu0 0
          %1578 = vmatpush1.bf16.msra.mxu0 %v1570
          %1579 = vmatprep.subr.bf16.mxu0 0
          %1580 = vmatpush1.bf16.msra.mxu0 %v1571
          %1581 = vmatprep.subr.bf16.mxu0 0
          %1582 = vmatpush1.bf16.msra.mxu0 0
          %1583 = vmatprep.subr.bf16.mxu0 0
          %1584 = vmatpush1.bf16.msra.mxu0 0
          %1585 = vmatprep.subr.bf16.mxu0 0
          %1586 = vmatpush1.bf16.msra.mxu0 0
          %1587 = vmatprep.subr.bf16.mxu0 0
          %1588 = vmatpush1.bf16.msra.mxu0 0
          %1589 = vmatprep.subr.bf16.mxu0 0
          %1590 = vmatpush1.bf16.msra.mxu0 0
          %1591 = vmatprep.subr.bf16.mxu0 0
          %1592 = vmatpush1.bf16.msra.mxu0 0
          %1593 = vmatprep.subr.bf16.mxu0 0
          %1594 = vmatpush1.bf16.msra.mxu0 0
          %1595 = vmatprep.subr.bf16.mxu0 0
          %1596 = vmatpush1.bf16.msra.mxu0 0
          %1597 = vmatprep.subr.bf16.mxu0 0
          %1598 = vmatpush1.bf16.msra.mxu0 0
          %1599 = vmatprep.subr.bf16.mxu0 0
          %1600 = vmatpush1.bf16.msra.mxu0 0
          %1601 = vmatprep.subr.bf16.mxu0 0
          %1602 = vmatpush1.bf16.msra.mxu0 0
          %1603 = vmatprep.subr.bf16.mxu0 0
          %1604 = vmatpush1.bf16.msra.mxu0 0
          %1605 = vmatprep.subr.bf16.mxu0 0
          %1606 = vmatpush1.bf16.msra.mxu0 0
          %1607 = vmatprep.subr.bf16.mxu0 0
          %1608 = vmatpush1.bf16.msra.mxu0 0
          %1609 = vmatprep.mubr.bf16.mxu0 0
          %1610 = vmatmul.mubr.bf16.gmra.mrb[0].mxu0 %v1575
          %v1611 = vpop.f32.mrb[0].mxu0
          %v1612 = vadd.f32 %v1560, %v1611
          %v1613 = vpop.f32.mrb[0].mxu0
          %v1614 = vpop.f32.mrb[0].mxu0
          %v1615 = vpop.f32.mrb[0].mxu0
          %1616 = vdwg.mxu0
          %v1617 = vld [vmem:[%s701] sm:$0xff]
          %v1618 = vadd.f32 %v1617, %v1612
          %v1619 = vld [vmem:[#allocation14] sm:$0x1]
          %v1620 = vld [vmem:[#allocation15] sm:$0x1]
          %v1621 = vsel %vm860, %v1618, 0.0
          %1622 = vadd.xlane.f32.xlu0 %v1621
          %v1623 = vpop.xlane.xlu0 %1622
          %v1624 = vmul.f32 %v1623, %v864
          %v1625 = vsub.f32 %v1618, %v1624
          %v1626 = vmul.f32 %v1625, %v1625
          %v1627 = vsel %vm860, %v1626, 0.0
          %1628 = vadd.xlane.f32.xlu0 %v1627
          %v1629 = vpop.xlane.xlu0 %1628
          %v1630 = vmul.f32 %v1629, %v864
          %v1631 = vadd.f32 %v1630, 1e-05
          %v1632 = vrsqrt.pop %v1631
          %v1633 = vmul.f32 %v1625, %v1632
          %v1635 = vlaneseq
          %v1636 = vshrl.u32 %v1635, 7
          %v1637 = vsub.s32 0, %v1636
          %v1638 = vrot.slane %v1619, %v1637
          %v1640 = vmul.f32 %v1633, %v1638
          %v1642 = vlaneseq
          %v1643 = vshrl.u32 %v1642, 7
          %v1644 = vsub.s32 0, %v1643
          %v1645 = vrot.slane %v1620, %v1644
          %v1647 = vadd.f32 %v1640, %v1645
          %v1648 = vpack.c.bf16 %v1647, %v1647
          %v1649 = vld [vmem:[%s13] sm:$0xf]
          %v1650 = vld [vmem:[%s13 + $0x4] sm:$0xf]
          %v1651 = vld [vmem:[%s13 + $0x8] sm:$0xf]
          %v1652 = vld [vmem:[%s13 + $0xc] sm:$0xf]
          %v1653 = vld [vmem:[%s14] sm:$0x1]
          %v1655 = vlaneseq
          %v1656 = vshrl.u32 %v1655, 7
          %v1657 = vsub.s32 0, %v1656
          %v1658 = vrot.slane %v1653, %v1657
          %v1664 = vunpack.c.l.b16 %v1649
          %v1665 = vunpack.c.l.b16 %v1650
          %v1666 = vunpack.c.l.b16 %v1651
          %v1667 = vunpack.c.l.b16 %v1652
          %v1668 = vpack.c.b16 %v1665, %v1664
          %v1669 = vpack.c.b16 %v1667, %v1666
          %v1673 = vsel %vm860, %v1648, 0
          %1675 = vmatprep.subr.bf16.mxu0 0
          %1676 = vmatpush1.bf16.msra.mxu0 %v1668
          %1677 = vmatprep.subr.bf16.mxu0 0
          %1678 = vmatpush1.bf16.msra.mxu0 %v1669
          %1679 = vmatprep.subr.bf16.mxu0 0
          %1680 = vmatpush1.bf16.msra.mxu0 0
          %1681 = vmatprep.subr.bf16.mxu0 0
          %1682 = vmatpush1.bf16.msra.mxu0 0
          %1683 = vmatprep.subr.bf16.mxu0 0
          %1684 = vmatpush1.bf16.msra.mxu0 0
          %1685 = vmatprep.subr.bf16.mxu0 0
          %1686 = vmatpush1.bf16.msra.mxu0 0
          %1687 = vmatprep.subr.bf16.mxu0 0
          %1688 = vmatpush1.bf16.msra.mxu0 0
          %1689 = vmatprep.subr.bf16.mxu0 0
          %1690 = vmatpush1.bf16.msra.mxu0 0
          %1691 = vmatprep.subr.bf16.mxu0 0
          %1692 = vmatpush1.bf16.msra.mxu0 0
          %1693 = vmatprep.subr.bf16.mxu0 0
          %1694 = vmatpush1.bf16.msra.mxu0 0
          %1695 = vmatprep.subr.bf16.mxu0 0
          %1696 = vmatpush1.bf16.msra.mxu0 0
          %1697 = vmatprep.subr.bf16.mxu0 0
          %1698 = vmatpush1.bf16.msra.mxu0 0
          %1699 = vmatprep.subr.bf16.mxu0 0
          %1700 = vmatpush1.bf16.msra.mxu0 0
          %1701 = vmatprep.subr.bf16.mxu0 0
          %1702 = vmatpush1.bf16.msra.mxu0 0
          %1703 = vmatprep.subr.bf16.mxu0 0
          %1704 = vmatpush1.bf16.msra.mxu0 0
          %1705 = vmatprep.subr.bf16.mxu0 0
          %1706 = vmatpush1.bf16.msra.mxu0 0
          %1707 = vmatprep.mubr.bf16.mxu0 0
          %1708 = vmatmul.mubr.bf16.gmra.mrb[0].mxu0 %v1673
          %v1709 = vpop.f32.mrb[0].mxu0
          %v1710 = vadd.f32 %v1658, %v1709
          %v1711 = vpop.f32.mrb[0].mxu0
          %v1712 = vpop.f32.mrb[0].mxu0
          %v1713 = vpop.f32.mrb[0].mxu0
          %1714 = vdwg.mxu0
          %v1715 = vmul.f32 %v1710, %v1710
          %v1716 = vmul.f32 %v1710, %v1715
          %v1717 = vmul.f32 %v1716, 0.044715
          %v1718 = vadd.f32 %v1710, %v1717
          %v1719 = vmul.f32 %v1718, 0.7978846
          %v1720 = vtanh.pop %v1719
          %v1721 = vadd.f32 %v1720, 1.0
          %v1722 = vmul.f32 %v1721, 0.5
          %v1723 = vmul.f32 %v1710, %v1722
          %v1724 = vpack.c.bf16 %v1723, %v1723
          %v1725 = vld [vmem:[%s15] sm:$0xf]
          %v1726 = vld [vmem:[%s15 + $0x4] sm:$0xf]
          %v1727 = vld [vmem:[%s15 + $0x8] sm:$0xf]
          %v1728 = vld [vmem:[%s15 + $0xc] sm:$0xf]
          %v1729 = vld [vmem:[%s15 + $0x10] sm:$0xf]
          %v1730 = vld [vmem:[%s15 + $0x14] sm:$0xf]
          %v1731 = vld [vmem:[%s15 + $0x18] sm:$0xf]
          %v1732 = vld [vmem:[%s15 + $0x1c] sm:$0xf]
          %v1733 = vld [vmem:[%s15 + $0x20] sm:$0xf]
          %v1734 = vld [vmem:[%s15 + $0x24] sm:$0xf]
          %v1735 = vld [vmem:[%s15 + $0x28] sm:$0xf]
          %v1736 = vld [vmem:[%s15 + $0x2c] sm:$0xf]
          %v1737 = vld [vmem:[%s15 + $0x30] sm:$0xf]
          %v1738 = vld [vmem:[%s15 + $0x34] sm:$0xf]
          %v1739 = vld [vmem:[%s15 + $0x38] sm:$0xf]
          %v1740 = vld [vmem:[%s15 + $0x3c] sm:$0xf]
          %v1757 = vunpack.c.l.b16 %v1725
          %v1758 = vunpack.c.l.b16 %v1726
          %v1759 = vunpack.c.l.b16 %v1727
          %v1760 = vunpack.c.l.b16 %v1728
          %v1761 = vunpack.c.l.b16 %v1729
          %v1762 = vunpack.c.l.b16 %v1730
          %v1763 = vunpack.c.l.b16 %v1731
          %v1764 = vunpack.c.l.b16 %v1732
          %v1765 = vunpack.c.l.b16 %v1733
          %v1766 = vunpack.c.l.b16 %v1734
          %v1767 = vunpack.c.l.b16 %v1735
          %v1768 = vunpack.c.l.b16 %v1736
          %v1769 = vunpack.c.l.b16 %v1737
          %v1770 = vunpack.c.l.b16 %v1738
          %v1771 = vunpack.c.l.b16 %v1739
          %v1772 = vunpack.c.l.b16 %v1740
          %v1773 = vpack.c.b16 %v1758, %v1757
          %v1774 = vpack.c.b16 %v1760, %v1759
          %v1775 = vpack.c.b16 %v1762, %v1761
          %v1776 = vpack.c.b16 %v1764, %v1763
          %v1777 = vpack.c.b16 %v1766, %v1765
          %v1778 = vpack.c.b16 %v1768, %v1767
          %v1779 = vpack.c.b16 %v1770, %v1769
          %v1780 = vpack.c.b16 %v1772, %v1771
          %1789 = vmatprep.subr.bf16.mxu0 0
          %1790 = vmatpush1.bf16.msra.mxu0 %v1773
          %1791 = vmatprep.subr.bf16.mxu0 0
          %1792 = vmatpush1.bf16.msra.mxu0 %v1774
          %1793 = vmatprep.subr.bf16.mxu0 0
          %1794 = vmatpush1.bf16.msra.mxu0 %v1775
          %1795 = vmatprep.subr.bf16.mxu0 0
          %1796 = vmatpush1.bf16.msra.mxu0 %v1776
          %1797 = vmatprep.subr.bf16.mxu0 0
          %1798 = vmatpush1.bf16.msra.mxu0 %v1777
          %1799 = vmatprep.subr.bf16.mxu0 0
          %1800 = vmatpush1.bf16.msra.mxu0 %v1778
          %1801 = vmatprep.subr.bf16.mxu0 0
          %1802 = vmatpush1.bf16.msra.mxu0 %v1779
          %1803 = vmatprep.subr.bf16.mxu0 0
          %1804 = vmatpush1.bf16.msra.mxu0 %v1780
          %1805 = vmatprep.subr.bf16.mxu0 0
          %1806 = vmatpush1.bf16.msra.mxu0 0
          %1807 = vmatprep.subr.bf16.mxu0 0
          %1808 = vmatpush1.bf16.msra.mxu0 0
          %1809 = vmatprep.subr.bf16.mxu0 0
          %1810 = vmatpush1.bf16.msra.mxu0 0
          %1811 = vmatprep.subr.bf16.mxu0 0
          %1812 = vmatpush1.bf16.msra.mxu0 0
          %1813 = vmatprep.subr.bf16.mxu0 0
          %1814 = vmatpush1.bf16.msra.mxu0 0
          %1815 = vmatprep.subr.bf16.mxu0 0
          %1816 = vmatpush1.bf16.msra.mxu0 0
          %1817 = vmatprep.subr.bf16.mxu0 0
          %1818 = vmatpush1.bf16.msra.mxu0 0
          %1819 = vmatprep.subr.bf16.mxu0 0
          %1820 = vmatpush1.bf16.msra.mxu0 0
          %1821 = vmatprep.mubr.bf16.mxu0 0
          %1822 = vmatmul.mubr.bf16.gmra.mrb[0].mxu0 %v1724
          %v1823 = vpop.f32.mrb[0].mxu0
          %v1824 = vadd.f32 0.0, %v1823
          %v1825 = vpop.f32.mrb[0].mxu0
          %v1826 = vpop.f32.mrb[0].mxu0
          %v1827 = vpop.f32.mrb[0].mxu0
          %1828 = vdwg.mxu0
          %v1829 = vadd.f32 %v1618, %v1824
          %v1830 = vld [vmem:[%s16] sm:$0x1]
          %v1832 = vlaneseq
          %v1833 = vshrl.u32 %v1832, 7
          %v1834 = vsub.s32 0, %v1833
          %v1835 = vrot.slane %v1830, %v1834
          %v1837 = vadd.f32 %v1829, %v1835
          %1838 = vst.msk [vmem:[%s694] sm:$0xff] %vm860, %v1837
        $region120: #{tpu_custom_call.1} parent=87 // pred_fallthru
          _
        %s1839 = sand.u32 %s444, 1
        %s1840 = scalar_lea.sflag [#allocation8], %s1839
        %s1841 = sand.u32 %s444, 1
        %s1842 = smul.addr %s1841, 8
        %s1843 = scalar_lea.vmem [#allocation17], %s1842
        // Predicated region
        $region121: #{tpu_custom_call.1} parent=87 // pred_check
          %p1844 = pneg %p454
        $region122: #{tpu_custom_call.1} parent=87 // pred_check_branch
          %1846 = sbr.rel (%p1844) target = $region124
        $region123: #{tpu_custom_call.1} parent=87 // pred_region
          %s1848 = ssub.s32 128, 128
          %1849 = vsyncadd %s1840, %s1848
          %s1850 = sadd.s32 %s41, %s40
          %s1851 = smul.addr %s1850, 128
          %s1852 = scalar_lea.hbm %s17, %s1851
          %s1854 = sshll.u32 %s1843, 4
          %s1855 = int_to_ptr.vmem [resolvable:$true] %s1854
          %1857 = dma.vmem_to_hbm [thread:$0]  %s1855, 128, %s1852, %s1840
        $region124: #{tpu_custom_call.1} parent=87 // pred_fallthru
          _
      $region88: #{tpu_custom_call.1} parent=5 // pred_fallthru
        _
      %p1858 = scmp.le.s32.totalorder 2, %s30
      // Predicated region
      $region125: #{tpu_custom_call.1} parent=5 // pred_check
        %p1859 = pneg %p1858
      $region126: #{tpu_custom_call.1} parent=5 // pred_check_branch
        %1861 = sbr.rel (%p1859) target = $region128
      $region127: #{tpu_custom_call.1} parent=5 // pred_region
        %s1862 = ssub.s32 %s30, 2
        // Predicated region
        $region129: #{tpu_custom_call.1} parent=127 // pred_check
          %p1863 = pneg %p460
        $region130: #{tpu_custom_call.1} parent=127 // pred_check_branch
          %1865 = sbr.rel (%p1863) target = $region132
        $region131: #{tpu_custom_call.1} parent=127 // pred_region
          %s1866 = sand.u32 %s445, 1
          %s1867 = scalar_lea.sflag [#allocation8], %s1866
          %s1868 = sand.u32 %s445, 1
          %s1869 = smul.addr %s1868, 8
          %s1870 = scalar_lea.vmem [#allocation17], %s1869
          %1871 = dma.done %s1867, 128
        $region132: #{tpu_custom_call.1} parent=127 // pred_fallthru
          _
      $region128: #{tpu_custom_call.1} parent=5 // pred_fallthru
        _
    $region6: #{tpu_custom_call.1} parent=1 // loop_footer
      %s34 = sadd.s32 1, %s30
    $region7: #{tpu_custom_call.1} parent=1 // loop_footer_branch
      %29 = sbr.rel target = $region3
    $region8: #{tpu_custom_call.1} parent=1 // loop_exit
      _
    %1872 = vsyncpa [#allocation7], 1
    %s1873 = scalar_lea.sflag [#allocation7], 1
    %1874 = vsyncpa %s1873, 1
    %1875 = vsyncpa [#allocation10], 1
    %1876 = vsyncpa [#allocation13], 1
    %1877 = vsyncpa [#allocation16], 1
    %1878 = vsyncpa [#allocation8], 1
    %s1879 = scalar_lea.sflag [#allocation8], 1
    %1880 = vsyncpa %s1879, 1

</llo_original>
